<compile_context>
chip_gen: v7x
topology: tpu7x:2x2x1
jax: 0.10.0
libtpu: 0.0.40
codegen_flags: <defaults>
</compile_context>

<pallas_src>
import functools

import jax
import jax.numpy as jnp
from jax.experimental import pallas as pl
from jax.experimental.pallas import tpu as pltpu


def _bn_mlp_kernel(x_ref, w0_ref, w1_ref, w2_ref, gb_ref, o_ref, *, h1, h2, valid_out):
    eps = 1e-5

    def linear_bn_relu(h_bf16, w_ref, gb):
        # MXU: bf16 x bf16 -> f32 accumulation (Linear bias cancelled by training-mode BN).
        y = jnp.dot(h_bf16, w_ref[...], preferred_element_type=jnp.float32)
        # Training-mode BatchNorm1d: batch mean + biased variance, one pass over y.
        mean = jnp.mean(y, axis=0, keepdims=True)
        mean_sq = jnp.mean(y * y, axis=0, keepdims=True)
        var = jnp.maximum(mean_sq - mean * mean, 0.0)      # clamp: one-pass var can cancel < 0
        gamma = gb[0:1, :]
        beta = gb[1:2, :]
        scale = gamma * jax.lax.rsqrt(var + eps)           # EUP rsqrt (free slot vs VALU)
        shift = beta - mean * scale
        return jnp.maximum(y * scale + shift, 0.0)         # folded affine + ReLU, f32 VPU

    gb = gb_ref[...]                                       # (2, h1+h2+out_pad) f32, one load
    h = linear_bn_relu(x_ref[...].astype(jnp.bfloat16), w0_ref, gb[:, 0:h1])
    h = linear_bn_relu(h.astype(jnp.bfloat16), w1_ref, gb[:, h1:h1 + h2])
    h = linear_bn_relu(h.astype(jnp.bfloat16), w2_ref, gb[:, h1 + h2:])

    # log_softmax over the first `valid_out` lanes; remaining lanes are zero padding
    # that must not contribute to the max / sum.
    n_pad = h.shape[1]
    lane = jax.lax.broadcasted_iota(jnp.int32, (1, n_pad), 1)
    valid = lane < valid_out
    m = jnp.max(jnp.where(valid, h, -jnp.inf), axis=1, keepdims=True)
    z = h - m
    denom = jnp.sum(jnp.where(valid, jnp.exp(z), 0.0), axis=1, keepdims=True)
    o_ref[...] = (z - jnp.log(denom)).astype(o_ref.dtype)  # lane-dense (B, out_pad) store


def prepare_params(params):
    """One-time parameter prep (hoisted out of the forward path): bf16 weight casts,
    lane padding of the last layer to a multiple of 128, and gamma/beta for all layers
    packed into a single (2, H1+H2+OUT_pad) f32 array. Call once, reuse every forward.

    Linear biases b0/b1/b2 are intentionally dropped: training-mode BN (batch stats)
    cancels them exactly. If eval-mode / running statistics are ever added, the biases
    must be reintroduced.
    """
    h1 = params["w0"].shape[1]
    h2 = params["w1"].shape[1]
    out_size = params["w2"].shape[1]
    out_pad = ((out_size + 127) // 128) * 128

    w0 = params["w0"].astype(jnp.bfloat16)
    w1 = params["w1"].astype(jnp.bfloat16)
    w2 = jnp.pad(params["w2"], ((0, 0), (0, out_pad - out_size))).astype(jnp.bfloat16)

    gamma = jnp.concatenate(
        [params["g0"], params["g1"],
         jnp.pad(params["g2"], ((0, 0), (0, out_pad - out_size)))], axis=1)
    beta = jnp.concatenate(
        [params["be0"], params["be1"],
         jnp.pad(params["be2"], ((0, 0), (0, out_pad - out_size)))], axis=1)
    gb = jnp.concatenate([gamma, beta], axis=0)            # (2, h1+h2+out_pad) f32

    return {"w0": w0, "w1": w1, "w2": w2, "gb": gb,
            "h1": h1, "h2": h2, "out_size": out_size, "out_pad": out_pad}


def batchnorm_nn_forward(x, prepped, *, return_padded=False):
    """x: (B, image_size) float32 (already flattened). prepped: output of prepare_params.
    Returns (B, out_size) f32 log-probs (or the lane-dense (B, out_pad) slab if
    return_padded=True, so the consumer can avoid the extra slice op)."""
    B = x.shape[0]
    h1, h2 = prepped["h1"], prepped["h2"]
    out_size, out_pad = prepped["out_size"], prepped["out_pad"]

    ins = [x, prepped["w0"], prepped["w1"], prepped["w2"], prepped["gb"]]

    def full_spec(a):
        zero_block = (0,) * a.ndim
        return pl.BlockSpec(a.shape, lambda *_: zero_block)   # whole array resident in VMEM

    # Explicit VMEM budget: inputs + output + ~2 resident f32 activation planes,
    # with headroom; capped at the 64 MiB v7x physical VMEM per TensorCore.
    in_bytes = sum(int(a.size) * a.dtype.itemsize for a in ins)
    out_bytes = B * out_pad * 4
    act_bytes = 2 * B * max(h1, h2, out_pad) * 4
    vmem_limit = int(min(max(4 * (in_bytes + out_bytes + act_bytes), 16 << 20), 64 << 20))

    out_padded = pl.pallas_call(
        functools.partial(_bn_mlp_kernel, h1=h1, h2=h2, valid_out=out_size),
        out_shape=jax.ShapeDtypeStruct((B, out_pad), jnp.float32),
        grid=(),
        in_specs=[full_spec(a) for a in ins],
        out_specs=pl.BlockSpec((B, out_pad), lambda *_: (0, 0)),
        compiler_params=pltpu.CompilerParams(vmem_limit_bytes=vmem_limit),
    )(*ins)

    if return_padded:
        return out_padded
    return out_padded[:, :out_size]


def init_params(key, image_size, h1, h2, out_size):
    """Deterministic init mimicking PyTorch defaults:
       Linear: U(-1/sqrt(fan_in), 1/sqrt(fan_in)) for weight and bias
       BatchNorm1d: weight=1, bias=0."""
    def linear(key, fan_in, fan_out):
        kw, kb = jax.random.split(key)
        bound = 1.0 / jnp.sqrt(float(fan_in))
        # PyTorch weight is (out, in); store transposed (in, out) for x @ W
        w = jax.random.uniform(kw, (fan_in, fan_out), jnp.float32, -bound, bound)
        b = jax.random.uniform(kb, (1, fan_out), jnp.float32, -bound, bound)
        return w, b

    k0, k1, k2 = jax.random.split(key, 3)
    w0, b0 = linear(k0, image_size, h1)
    w1, b1 = linear(k1, h1, h2)
    w2, b2 = linear(k2, h2, out_size)
    return {
        "w0": w0, "b0": b0, "g0": jnp.ones((1, h1), jnp.float32), "be0": jnp.zeros((1, h1), jnp.float32),
        "w1": w1, "b1": b1, "g1": jnp.ones((1, h2), jnp.float32), "be1": jnp.zeros((1, h2), jnp.float32),
        "w2": w2, "b2": b2, "g2": jnp.ones((1, out_size), jnp.float32), "be2": jnp.zeros((1, out_size), jnp.float32),
    }


def reference_forward(x, params, *, bf16_matmul):
    """Pure-JAX reference of the PyTorch forward (training-mode BatchNorm, with Linear
    bias and two-pass variance). bf16_matmul=True mirrors the kernel's MXU operand dtype."""
    eps = 1e-5

    def layer(h, w, b, g, be):
        if bf16_matmul:
            y = jnp.dot(h.astype(jnp.bfloat16), w.astype(jnp.bfloat16),
                        preferred_element_type=jnp.float32) + b
        else:
            y = h @ w + b
        mean = jnp.mean(y, axis=0, keepdims=True)
        var = jnp.mean((y - mean) ** 2, axis=0, keepdims=True)
        y = (y - mean) / jnp.sqrt(var + eps) * g + be
        return jnp.maximum(y, 0.0)

    h = layer(x, params["w0"], params["b0"], params["g0"], params["be0"])
    h = layer(h, params["w1"], params["b1"], params["g1"], params["be1"])
    h = layer(h, params["w2"], params["b2"], params["g2"], params["be2"])
    return jax.nn.log_softmax(h, axis=1)


if __name__ == "__main__":
    # MNIST-like but lane-dense: batch=256, image 1x16x16 -> image_size=256,
    # hidden1=128, hidden2=128, output=10 (padded to 128 lanes inside the kernel).
    B, IMG, H1, H2, OUT = 256, 256, 128, 128, 10

    key = jax.random.PRNGKey(0)
    kx, kp = jax.random.split(key)
    x_img = jax.random.normal(kx, (B, 1, 16, 16), jnp.float32)   # NCHW-style input
    x = x_img.reshape(-1, IMG)                                    # x.view(-1, image_size)

    params = init_params(kp, IMG, H1, H2, OUT)
    prepped = prepare_params(params)                              # one-time prep, reused per call

    out = batchnorm_nn_forward(x, prepped)
    out = jax.block_until_ready(out)
    assert out.shape == (B, OUT)

    # Tight check vs a reference that mirrors the kernel's bf16 MXU operands
    # (validates the BN algebra: bias cancellation, one-pass variance + clamp,
    # folded affine, masked log-softmax over the padded slab).
    ref_bf16 = reference_forward(x, params, bf16_matmul=True)
    assert jnp.allclose(out, ref_bf16, atol=5e-3, rtol=5e-3), "mismatch vs bf16-matched reference"

    # Coarse semantic check vs exact f32 PyTorch-style math (only difference is bf16
    # rounding of the matmul operands).
    ref_f32 = reference_forward(x, params, bf16_matmul=False)
    assert jnp.allclose(out, ref_f32, atol=1e-1, rtol=1e-1), "mismatch vs f32 reference"

    print("KERNEL_OK")
</pallas_src>

<mosaic_0001>
module attributes {stable_mosaic.version = 11 : i64} {
  func.func @_bn_mlp_kernel(%arg0: memref<256x256xf32, #tpu.memory_space<vmem>>, %arg1: memref<256x128xbf16, #tpu.memory_space<vmem>>, %arg2: memref<128x128xbf16, #tpu.memory_space<vmem>>, %arg3: memref<128x128xbf16, #tpu.memory_space<vmem>>, %arg4: memref<2x384xf32, #tpu.memory_space<vmem>>, %arg5: memref<256x128xf32, #tpu.memory_space<vmem>>) attributes {dimension_semantics = [], scalar_prefetch = 0 : i64, scratch_operands = 0 : i64, tpu.core_type = #tpu.core_type<tc>} {
    %c0 = arith.constant 0 : index
    %c0_0 = arith.constant 0 : index
    %0 = vector.load %arg4[%c0, %c0_0] : memref<2x384xf32, #tpu.memory_space<vmem>>, vector<2x384xf32>
    %c0_1 = arith.constant 0 : index
    %c0_2 = arith.constant 0 : index
    %1 = vector.load %arg0[%c0_1, %c0_2] : memref<256x256xf32, #tpu.memory_space<vmem>>, vector<256x256xf32>
    %2 = arith.truncf %1 : vector<256x256xf32> to vector<256x256xbf16>
    %3 = vector.extract_strided_slice %0 {offsets = [0, 0], sizes = [2, 128], strides = [1, 1]} : vector<2x384xf32> to vector<2x128xf32>
    %c0_3 = arith.constant 0 : index
    %c0_4 = arith.constant 0 : index
    %4 = vector.load %arg1[%c0_3, %c0_4] : memref<256x128xbf16, #tpu.memory_space<vmem>>, vector<256x128xbf16>
    %cst = arith.constant dense<0.000000e+00> : vector<256x128xf32>
    %5 = tpu.matmul %2, %4, %cst {dimension_numbers = #tpu.dot_dimension_numbers<[1], [0], [0], [1], [0, 0, 1, 1], [], []>} : vector<256x256xbf16>, vector<256x128xbf16>, vector<256x128xf32> -> vector<256x128xf32>
    %cst_5 = arith.constant dense<0.000000e+00> : vector<128xf32>
    %6 = vector.multi_reduction <add>, %5, %cst_5 [0] : vector<256x128xf32> to vector<128xf32>
    %7 = vector.shape_cast %6 : vector<128xf32> to vector<1x128xf32>
    %cst_6 = arith.constant 2.560000e+02 : f32
    %8 = vector.broadcast %cst_6 : f32 to vector<1x128xf32>
    %9 = arith.divf %7, %8 : vector<1x128xf32>
    %10 = arith.mulf %5, %5 : vector<256x128xf32>
    %cst_7 = arith.constant dense<0.000000e+00> : vector<128xf32>
    %11 = vector.multi_reduction <add>, %10, %cst_7 [0] : vector<256x128xf32> to vector<128xf32>
    %12 = vector.shape_cast %11 : vector<128xf32> to vector<1x128xf32>
    %cst_8 = arith.constant 2.560000e+02 : f32
    %13 = vector.broadcast %cst_8 : f32 to vector<1x128xf32>
    %14 = arith.divf %12, %13 : vector<1x128xf32>
    %15 = arith.mulf %9, %9 : vector<1x128xf32>
    %16 = arith.subf %14, %15 : vector<1x128xf32>
    %cst_9 = arith.constant 0.000000e+00 : f32
    %17 = vector.broadcast %cst_9 : f32 to vector<1x128xf32>
    %18 = arith.maximumf %16, %17 : vector<1x128xf32>
    %19 = vector.extract_strided_slice %3 {offsets = [0, 0], sizes = [1, 128], strides = [1, 1]} : vector<2x128xf32> to vector<1x128xf32>
    %20 = vector.extract_strided_slice %3 {offsets = [1, 0], sizes = [1, 128], strides = [1, 1]} : vector<2x128xf32> to vector<1x128xf32>
    %cst_10 = arith.constant 9.99999974E-6 : f32
    %21 = vector.broadcast %cst_10 : f32 to vector<1x128xf32>
    %22 = arith.addf %18, %21 : vector<1x128xf32>
    %23 = math.rsqrt %22 : vector<1x128xf32>
    %24 = arith.mulf %19, %23 : vector<1x128xf32>
    %25 = arith.mulf %9, %24 : vector<1x128xf32>
    %26 = arith.subf %20, %25 : vector<1x128xf32>
    %27 = vector.broadcast %24 : vector<1x128xf32> to vector<256x128xf32>
    %28 = arith.mulf %5, %27 : vector<256x128xf32>
    %29 = vector.broadcast %26 : vector<1x128xf32> to vector<256x128xf32>
    %30 = arith.addf %28, %29 : vector<256x128xf32>
    %cst_11 = arith.constant 0.000000e+00 : f32
    %31 = vector.broadcast %cst_11 : f32 to vector<256x128xf32>
    %32 = arith.maximumf %30, %31 : vector<256x128xf32>
    %33 = arith.truncf %32 : vector<256x128xf32> to vector<256x128xbf16>
    %34 = vector.extract_strided_slice %0 {offsets = [0, 128], sizes = [2, 128], strides = [1, 1]} : vector<2x384xf32> to vector<2x128xf32>
    %c0_12 = arith.constant 0 : index
    %c0_13 = arith.constant 0 : index
    %35 = vector.load %arg2[%c0_12, %c0_13] : memref<128x128xbf16, #tpu.memory_space<vmem>>, vector<128x128xbf16>
    %cst_14 = arith.constant dense<0.000000e+00> : vector<256x128xf32>
    %36 = tpu.matmul %33, %35, %cst_14 {dimension_numbers = #tpu.dot_dimension_numbers<[1], [0], [0], [1], [0, 0, 1, 1], [], []>} : vector<256x128xbf16>, vector<128x128xbf16>, vector<256x128xf32> -> vector<256x128xf32>
    %cst_15 = arith.constant dense<0.000000e+00> : vector<128xf32>
    %37 = vector.multi_reduction <add>, %36, %cst_15 [0] : vector<256x128xf32> to vector<128xf32>
    %38 = vector.shape_cast %37 : vector<128xf32> to vector<1x128xf32>
    %cst_16 = arith.constant 2.560000e+02 : f32
    %39 = vector.broadcast %cst_16 : f32 to vector<1x128xf32>
    %40 = arith.divf %38, %39 : vector<1x128xf32>
    %41 = arith.mulf %36, %36 : vector<256x128xf32>
    %cst_17 = arith.constant dense<0.000000e+00> : vector<128xf32>
    %42 = vector.multi_reduction <add>, %41, %cst_17 [0] : vector<256x128xf32> to vector<128xf32>
    %43 = vector.shape_cast %42 : vector<128xf32> to vector<1x128xf32>
    %cst_18 = arith.constant 2.560000e+02 : f32
    %44 = vector.broadcast %cst_18 : f32 to vector<1x128xf32>
    %45 = arith.divf %43, %44 : vector<1x128xf32>
    %46 = arith.mulf %40, %40 : vector<1x128xf32>
    %47 = arith.subf %45, %46 : vector<1x128xf32>
    %cst_19 = arith.constant 0.000000e+00 : f32
    %48 = vector.broadcast %cst_19 : f32 to vector<1x128xf32>
    %49 = arith.maximumf %47, %48 : vector<1x128xf32>
    %50 = vector.extract_strided_slice %34 {offsets = [0, 0], sizes = [1, 128], strides = [1, 1]} : vector<2x128xf32> to vector<1x128xf32>
    %51 = vector.extract_strided_slice %34 {offsets = [1, 0], sizes = [1, 128], strides = [1, 1]} : vector<2x128xf32> to vector<1x128xf32>
    %cst_20 = arith.constant 9.99999974E-6 : f32
    %52 = vector.broadcast %cst_20 : f32 to vector<1x128xf32>
    %53 = arith.addf %49, %52 : vector<1x128xf32>
    %54 = math.rsqrt %53 : vector<1x128xf32>
    %55 = arith.mulf %50, %54 : vector<1x128xf32>
    %56 = arith.mulf %40, %55 : vector<1x128xf32>
    %57 = arith.subf %51, %56 : vector<1x128xf32>
    %58 = vector.broadcast %55 : vector<1x128xf32> to vector<256x128xf32>
    %59 = arith.mulf %36, %58 : vector<256x128xf32>
    %60 = vector.broadcast %57 : vector<1x128xf32> to vector<256x128xf32>
    %61 = arith.addf %59, %60 : vector<256x128xf32>
    %cst_21 = arith.constant 0.000000e+00 : f32
    %62 = vector.broadcast %cst_21 : f32 to vector<256x128xf32>
    %63 = arith.maximumf %61, %62 : vector<256x128xf32>
    %64 = arith.truncf %63 : vector<256x128xf32> to vector<256x128xbf16>
    %65 = vector.extract_strided_slice %0 {offsets = [0, 256], sizes = [2, 128], strides = [1, 1]} : vector<2x384xf32> to vector<2x128xf32>
    %c0_22 = arith.constant 0 : index
    %c0_23 = arith.constant 0 : index
    %66 = vector.load %arg3[%c0_22, %c0_23] : memref<128x128xbf16, #tpu.memory_space<vmem>>, vector<128x128xbf16>
    %cst_24 = arith.constant dense<0.000000e+00> : vector<256x128xf32>
    %67 = tpu.matmul %64, %66, %cst_24 {dimension_numbers = #tpu.dot_dimension_numbers<[1], [0], [0], [1], [0, 0, 1, 1], [], []>} : vector<256x128xbf16>, vector<128x128xbf16>, vector<256x128xf32> -> vector<256x128xf32>
    %cst_25 = arith.constant dense<0.000000e+00> : vector<128xf32>
    %68 = vector.multi_reduction <add>, %67, %cst_25 [0] : vector<256x128xf32> to vector<128xf32>
    %69 = vector.shape_cast %68 : vector<128xf32> to vector<1x128xf32>
    %cst_26 = arith.constant 2.560000e+02 : f32
    %70 = vector.broadcast %cst_26 : f32 to vector<1x128xf32>
    %71 = arith.divf %69, %70 : vector<1x128xf32>
    %72 = arith.mulf %67, %67 : vector<256x128xf32>
    %cst_27 = arith.constant dense<0.000000e+00> : vector<128xf32>
    %73 = vector.multi_reduction <add>, %72, %cst_27 [0] : vector<256x128xf32> to vector<128xf32>
    %74 = vector.shape_cast %73 : vector<128xf32> to vector<1x128xf32>
    %cst_28 = arith.constant 2.560000e+02 : f32
    %75 = vector.broadcast %cst_28 : f32 to vector<1x128xf32>
    %76 = arith.divf %74, %75 : vector<1x128xf32>
    %77 = arith.mulf %71, %71 : vector<1x128xf32>
    %78 = arith.subf %76, %77 : vector<1x128xf32>
    %cst_29 = arith.constant 0.000000e+00 : f32
    %79 = vector.broadcast %cst_29 : f32 to vector<1x128xf32>
    %80 = arith.maximumf %78, %79 : vector<1x128xf32>
    %81 = vector.extract_strided_slice %65 {offsets = [0, 0], sizes = [1, 128], strides = [1, 1]} : vector<2x128xf32> to vector<1x128xf32>
    %82 = vector.extract_strided_slice %65 {offsets = [1, 0], sizes = [1, 128], strides = [1, 1]} : vector<2x128xf32> to vector<1x128xf32>
    %cst_30 = arith.constant 9.99999974E-6 : f32
    %83 = vector.broadcast %cst_30 : f32 to vector<1x128xf32>
    %84 = arith.addf %80, %83 : vector<1x128xf32>
    %85 = math.rsqrt %84 : vector<1x128xf32>
    %86 = arith.mulf %81, %85 : vector<1x128xf32>
    %87 = arith.mulf %71, %86 : vector<1x128xf32>
    %88 = arith.subf %82, %87 : vector<1x128xf32>
    %89 = vector.broadcast %86 : vector<1x128xf32> to vector<256x128xf32>
    %90 = arith.mulf %67, %89 : vector<256x128xf32>
    %91 = vector.broadcast %88 : vector<1x128xf32> to vector<256x128xf32>
    %92 = arith.addf %90, %91 : vector<256x128xf32>
    %cst_31 = arith.constant 0.000000e+00 : f32
    %93 = vector.broadcast %cst_31 : f32 to vector<256x128xf32>
    %94 = arith.maximumf %92, %93 : vector<256x128xf32>
    %95 = tpu.iota {dimensions = array<i32: 1>} : vector<1x128xi32>
    %c10_i32 = arith.constant 10 : i32
    %96 = vector.broadcast %c10_i32 : i32 to vector<1x128xi32>
    %97 = arith.cmpi slt, %95, %96 : vector<1x128xi32>
    %cst_32 = arith.constant 0xFF800000 : f32
    %98 = vector.shape_cast %97 : vector<1x128xi1> to vector<1x128xi1>
    %99 = vector.broadcast %98 : vector<1x128xi1> to vector<256x128xi1>
    %100 = vector.broadcast %cst_32 : f32 to vector<256x128xf32>
    %101 = arith.select %99, %94, %100 : vector<256x128xi1>, vector<256x128xf32>
    %cst_33 = arith.constant dense<0xFF800000> : vector<256xf32>
    %102 = vector.multi_reduction <maximumf>, %101, %cst_33 [1] : vector<256x128xf32> to vector<256xf32>
    %103 = vector.shape_cast %102 : vector<256xf32> to vector<256x1xf32>
    %104 = vector.broadcast %103 : vector<256x1xf32> to vector<256x128xf32>
    %105 = arith.subf %94, %104 : vector<256x128xf32>
    %106 = math.exp %105 : vector<256x128xf32>
    %cst_34 = arith.constant 0.000000e+00 : f32
    %107 = vector.shape_cast %97 : vector<1x128xi1> to vector<1x128xi1>
    %108 = vector.broadcast %107 : vector<1x128xi1> to vector<256x128xi1>
    %109 = vector.broadcast %cst_34 : f32 to vector<256x128xf32>
    %110 = arith.select %108, %106, %109 : vector<256x128xi1>, vector<256x128xf32>
    %cst_35 = arith.constant dense<0.000000e+00> : vector<256xf32>
    %111 = vector.multi_reduction <add>, %110, %cst_35 [1] : vector<256x128xf32> to vector<256xf32>
    %112 = vector.shape_cast %111 : vector<256xf32> to vector<256x1xf32>
    %113 = math.log %112 : vector<256x1xf32>
    %114 = vector.broadcast %113 : vector<256x1xf32> to vector<256x128xf32>
    %115 = arith.subf %105, %114 : vector<256x128xf32>
    %c0_36 = arith.constant 0 : index
    %c0_37 = arith.constant 0 : index
    %116 = vector.load %arg5[%c0_36, %c0_37] : memref<256x128xf32, #tpu.memory_space<vmem>>, vector<256x128xf32>
    tpu.vector_store %arg5[%c0_36, %c0_37], %115 {strides = array<i32>} : memref<256x128xf32, #tpu.memory_space<vmem>>, vector<256x128xf32>,
    return
  }
}

</mosaic_0001>

<llo_original>
// kernel: tpu_custom_call.1
$region0: #{tpu_custom_call.1}
  #allocation0 [shape = 'u32[]', space=smem, size = 0x4, offset = 0x4, fixed_abs, tag = 'smem constant byte address 0x4 - core index']
  #allocation1 [shape = 'u32[144,128]{1,0:T(1,128)}', space=vmem, size = 0x12000, scoped, tag = 'internal scratch']
  %s0 = inlined_call_operand.hbm [shape: f32[256,256], index: 0, kind: input, shape index: {}]
  %s1 = inlined_call_operand.hbm [shape: bf16[256,128], index: 1, kind: input, shape index: {}]
  %s2 = inlined_call_operand.hbm [shape: bf16[128,128], index: 2, kind: input, shape index: {}]
  %s3 = inlined_call_operand.hbm [shape: bf16[128,128], index: 3, kind: input, shape index: {}]
  %s4 = inlined_call_operand.vmem [shape: f32[2,384], index: 4, kind: input, shape index: {}]
  %s5 = inlined_call_operand.hbm [shape: f32[256,128], index: 5, kind: output, shape index: {}]
  %s6 = sld [smem:[#allocation0]]
  $region46: #{tpu_custom_call.1} parent=0
    _
  %s8 = ssub.s32 1, %s6
  %s9 = scalar_select 0, %s8, %s6
  $region1: #{tpu_custom_call.1} parent=0
    #allocation2 [shape = 'u8[262144]{0}', space=vmem, size = 0x40000, scoped, tag = 'input window, operand 0, single buffered']
    #allocation3 [shape = 's32[1]{0}', space=sflag, size = 0x4, scoped, tag = 'scoped memory for tpu_custom_call.1']
    #allocation4 [shape = 's32[1]{0}', space=sflag, size = 0x4, scoped, tag = 'scoped memory for tpu_custom_call.1']
    #allocation5 [shape = 'u8[65536]{0}', space=vmem, size = 0x10000, scoped, tag = 'input window, operand 1, single buffered']
    #allocation6 [shape = 's32[1]{0}', space=sflag, size = 0x4, scoped, tag = 'scoped memory for tpu_custom_call.1']
    #allocation7 [shape = 'u8[32768]{0}', space=vmem, size = 0x8000, scoped, tag = 'input window, operand 2, single buffered']
    #allocation8 [shape = 'u8[32768]{0}', space=vmem, size = 0x8000, scoped, tag = 'input window, operand 3, single buffered']
    #allocation9 [shape = 's32[1]{0}', space=sflag, size = 0x4, scoped, tag = 'scoped memory for tpu_custom_call.1']
    #allocation10 [shape = 'u8[131072]{0}', space=vmem, size = 0x20000, scoped, tag = 'output window, operand 0, single buffered']
    %10 = vsyncpa [#allocation3], 0
    %11 = vsyncpa [#allocation6], 0
    %12 = vsyncpa [#allocation9], 0
    %13 = vsyncpa [#allocation4], 0
    // Predicated region
    $region2: #{tpu_custom_call.1} parent=1 // pred_check
      _
    $region3: #{tpu_custom_call.1} parent=1 // pred_check_branch
      %15 = sbr.rel (0) target = $region5
    $region4: #{tpu_custom_call.1} parent=1 // pred_region
      %s17 = ssub.s32 8192, 8192
      %18 = vsyncadd [#allocation3], %s17
      %s19 = sshll.u32 [#allocation2], 4
      %s20 = int_to_ptr.vmem [resolvable:$true] %s19
      %25 = dma.hbm_to_vmem [thread:$0]  %s0, 8192, %s20, [#allocation3], 256, 256, 16
    $region5: #{tpu_custom_call.1} parent=1 // pred_fallthru
      _
    // Predicated region
    $region6: #{tpu_custom_call.1} parent=1 // pred_check
      _
    $region7: #{tpu_custom_call.1} parent=1 // pred_check_branch
      %27 = sbr.rel (0) target = $region9
    $region8: #{tpu_custom_call.1} parent=1 // pred_region
      %s29 = ssub.s32 2048, 2048
      %30 = vsyncadd [#allocation6], %s29
      %s31 = sshll.u32 [#allocation5], 4
      %s32 = int_to_ptr.vmem [resolvable:$true] %s31
      %37 = dma.hbm_to_vmem [thread:$0]  %s1, 2048, %s32, [#allocation6], 64, 64, 4
    $region9: #{tpu_custom_call.1} parent=1 // pred_fallthru
      _
    // Predicated region
    $region10: #{tpu_custom_call.1} parent=1 // pred_check
      _
    $region11: #{tpu_custom_call.1} parent=1 // pred_check_branch
      %39 = sbr.rel (0) target = $region13
    $region12: #{tpu_custom_call.1} parent=1 // pred_region
      %s41 = ssub.s32 1024, 1024
      %42 = vsyncadd [#allocation6], %s41
      %s43 = sshll.u32 [#allocation7], 4
      %s44 = int_to_ptr.vmem [resolvable:$true] %s43
      %49 = dma.hbm_to_vmem [thread:$0]  %s2, 1024, %s44, [#allocation6], 64, 64, 4
    $region13: #{tpu_custom_call.1} parent=1 // pred_fallthru
      _
    // Predicated region
    $region14: #{tpu_custom_call.1} parent=1 // pred_check
      _
    $region15: #{tpu_custom_call.1} parent=1 // pred_check_branch
      %51 = sbr.rel (0) target = $region17
    $region16: #{tpu_custom_call.1} parent=1 // pred_region
      %s53 = ssub.s32 1024, 1024
      %54 = vsyncadd [#allocation9], %s53
      %s55 = sshll.u32 [#allocation8], 4
      %s56 = int_to_ptr.vmem [resolvable:$true] %s55
      %61 = dma.hbm_to_vmem [thread:$0]  %s3, 1024, %s56, [#allocation9], 64, 64, 4
    $region17: #{tpu_custom_call.1} parent=1 // pred_fallthru
      _
    // Predicated region
    $region18: #{tpu_custom_call.1} parent=1 // pred_check
      _
    $region19: #{tpu_custom_call.1} parent=1 // pred_check_branch
      %63 = sbr.rel (0) target = $region21
    $region20: #{tpu_custom_call.1} parent=1 // pred_region
      _
    $region21: #{tpu_custom_call.1} parent=1 // pred_fallthru
      _
    // Predicated region
    $region22: #{tpu_custom_call.1} parent=1 // pred_check
      _
    $region23: #{tpu_custom_call.1} parent=1 // pred_check_branch
      %65 = sbr.rel (0) target = $region25
    $region24: #{tpu_custom_call.1} parent=1 // pred_region
      %66 = dma.done [#allocation3], 8192
    $region25: #{tpu_custom_call.1} parent=1 // pred_fallthru
      _
    // Predicated region
    $region26: #{tpu_custom_call.1} parent=1 // pred_check
      _
    $region27: #{tpu_custom_call.1} parent=1 // pred_check_branch
      %68 = sbr.rel (0) target = $region29
    $region28: #{tpu_custom_call.1} parent=1 // pred_region
      %69 = dma.done [#allocation6], 2048
    $region29: #{tpu_custom_call.1} parent=1 // pred_fallthru
      _
    // Predicated region
    $region30: #{tpu_custom_call.1} parent=1 // pred_check
      _
    $region31: #{tpu_custom_call.1} parent=1 // pred_check_branch
      %71 = sbr.rel (0) target = $region33
    $region32: #{tpu_custom_call.1} parent=1 // pred_region
      %72 = dma.done [#allocation6], 1024
    $region33: #{tpu_custom_call.1} parent=1 // pred_fallthru
      _
    // Predicated region
    $region34: #{tpu_custom_call.1} parent=1 // pred_check
      _
    $region35: #{tpu_custom_call.1} parent=1 // pred_check_branch
      %74 = sbr.rel (0) target = $region37
    $region36: #{tpu_custom_call.1} parent=1 // pred_region
      %75 = dma.done [#allocation9], 1024
    $region37: #{tpu_custom_call.1} parent=1 // pred_fallthru
      _
    %v77 = vld [vmem:[%s4] sm:$0x3f]
    %v78 = vld [vmem:[#allocation2] sm:$0xff]
    %v79 = vld [vmem:[#allocation2 + $0x8] sm:$0xff]
    %v80 = vld [vmem:[#allocation2 + $0x10] sm:$0xff]
    %v81 = vld [vmem:[#allocation2 + $0x18] sm:$0xff]
    %v82 = vld [vmem:[#allocation2 + $0x20] sm:$0xff]
    %v83 = vld [vmem:[#allocation2 + $0x28] sm:$0xff]
    %v84 = vld [vmem:[#allocation2 + $0x30] sm:$0xff]
    %v85 = vld [vmem:[#allocation2 + $0x38] sm:$0xff]
    %v86 = vld [vmem:[#allocation2 + $0x40] sm:$0xff]
    %v87 = vld [vmem:[#allocation2 + $0x48] sm:$0xff]
    %v88 = vld [vmem:[#allocation2 + $0x50] sm:$0xff]
    %v89 = vld [vmem:[#allocation2 + $0x58] sm:$0xff]
    %v90 = vld [vmem:[#allocation2 + $0x60] sm:$0xff]
    %v91 = vld [vmem:[#allocation2 + $0x68] sm:$0xff]
    %v92 = vld [vmem:[#allocation2 + $0x70] sm:$0xff]
    %v93 = vld [vmem:[#allocation2 + $0x78] sm:$0xff]
    %v94 = vld [vmem:[#allocation2 + $0x80] sm:$0xff]
    %v95 = vld [vmem:[#allocation2 + $0x88] sm:$0xff]
    %v96 = vld [vmem:[#allocation2 + $0x90] sm:$0xff]
    %v97 = vld [vmem:[#allocation2 + $0x98] sm:$0xff]
    %v98 = vld [vmem:[#allocation2 + $0xa0] sm:$0xff]
    %v99 = vld [vmem:[#allocation2 + $0xa8] sm:$0xff]
    %v100 = vld [vmem:[#allocation2 + $0xb0] sm:$0xff]
    %v101 = vld [vmem:[#allocation2 + $0xb8] sm:$0xff]
    %v102 = vld [vmem:[#allocation2 + $0xc0] sm:$0xff]
    %v103 = vld [vmem:[#allocation2 + $0xc8] sm:$0xff]
    %v104 = vld [vmem:[#allocation2 + $0xd0] sm:$0xff]
    %v105 = vld [vmem:[#allocation2 + $0xd8] sm:$0xff]
    %v106 = vld [vmem:[#allocation2 + $0xe0] sm:$0xff]
    %v107 = vld [vmem:[#allocation2 + $0xe8] sm:$0xff]
    %v108 = vld [vmem:[#allocation2 + $0xf0] sm:$0xff]
    %v109 = vld [vmem:[#allocation2 + $0xf8] sm:$0xff]
    %v110 = vld [vmem:[#allocation2 + $0x100] sm:$0xff]
    %v111 = vld [vmem:[#allocation2 + $0x108] sm:$0xff]
    %v112 = vld [vmem:[#allocation2 + $0x110] sm:$0xff]
    %v113 = vld [vmem:[#allocation2 + $0x118] sm:$0xff]
    %v114 = vld [vmem:[#allocation2 + $0x120] sm:$0xff]
    %v115 = vld [vmem:[#allocation2 + $0x128] sm:$0xff]
    %v116 = vld [vmem:[#allocation2 + $0x130] sm:$0xff]
    %v117 = vld [vmem:[#allocation2 + $0x138] sm:$0xff]
    %v118 = vld [vmem:[#allocation2 + $0x140] sm:$0xff]
    %v119 = vld [vmem:[#allocation2 + $0x148] sm:$0xff]
    %v120 = vld [vmem:[#allocation2 + $0x150] sm:$0xff]
    %v121 = vld [vmem:[#allocation2 + $0x158] sm:$0xff]
    %v122 = vld [vmem:[#allocation2 + $0x160] sm:$0xff]
    %v123 = vld [vmem:[#allocation2 + $0x168] sm:$0xff]
    %v124 = vld [vmem:[#allocation2 + $0x170] sm:$0xff]
    %v125 = vld [vmem:[#allocation2 + $0x178] sm:$0xff]
    %v126 = vld [vmem:[#allocation2 + $0x180] sm:$0xff]
    %v127 = vld [vmem:[#allocation2 + $0x188] sm:$0xff]
    %v128 = vld [vmem:[#allocation2 + $0x190] sm:$0xff]
    %v129 = vld [vmem:[#allocation2 + $0x198] sm:$0xff]
    %v130 = vld [vmem:[#allocation2 + $0x1a0] sm:$0xff]
    %v131 = vld [vmem:[#allocation2 + $0x1a8] sm:$0xff]
    %v132 = vld [vmem:[#allocation2 + $0x1b0] sm:$0xff]
    %v133 = vld [vmem:[#allocation2 + $0x1b8] sm:$0xff]
    %v134 = vld [vmem:[#allocation2 + $0x1c0] sm:$0xff]
    %v135 = vld [vmem:[#allocation2 + $0x1c8] sm:$0xff]
    %v136 = vld [vmem:[#allocation2 + $0x1d0] sm:$0xff]
    %v137 = vld [vmem:[#allocation2 + $0x1d8] sm:$0xff]
    %v138 = vld [vmem:[#allocation2 + $0x1e0] sm:$0xff]
    %v139 = vld [vmem:[#allocation2 + $0x1e8] sm:$0xff]
    %v140 = vld [vmem:[#allocation2 + $0x1f0] sm:$0xff]
    %v141 = vld [vmem:[#allocation2 + $0x1f8] sm:$0xff]
    %v142 = vpack.c.bf16 %v80, %v78
    %v143 = vpack.c.bf16 %v81, %v79
    %v144 = vpack.c.bf16 %v84, %v82
    %v145 = vpack.c.bf16 %v85, %v83
    %v146 = vpack.c.bf16 %v88, %v86
    %v147 = vpack.c.bf16 %v89, %v87
    %v148 = vpack.c.bf16 %v92, %v90
    %v149 = vpack.c.bf16 %v93, %v91
    %v150 = vpack.c.bf16 %v96, %v94
    %v151 = vpack.c.bf16 %v97, %v95
    %v152 = vpack.c.bf16 %v100, %v98
    %v153 = vpack.c.bf16 %v101, %v99
    %v154 = vpack.c.bf16 %v104, %v102
    %v155 = vpack.c.bf16 %v105, %v103
    %v156 = vpack.c.bf16 %v108, %v106
    %v157 = vpack.c.bf16 %v109, %v107
    %v158 = vpack.c.bf16 %v112, %v110
    %v159 = vpack.c.bf16 %v113, %v111
    %v160 = vpack.c.bf16 %v116, %v114
    %v161 = vpack.c.bf16 %v117, %v115
    %v162 = vpack.c.bf16 %v120, %v118
    %v163 = vpack.c.bf16 %v121, %v119
    %v164 = vpack.c.bf16 %v124, %v122
    %v165 = vpack.c.bf16 %v125, %v123
    %v166 = vpack.c.bf16 %v128, %v126
    %v167 = vpack.c.bf16 %v129, %v127
    %v168 = vpack.c.bf16 %v132, %v130
    %v169 = vpack.c.bf16 %v133, %v131
    %v170 = vpack.c.bf16 %v136, %v134
    %v171 = vpack.c.bf16 %v137, %v135
    %v172 = vpack.c.bf16 %v140, %v138
    %v173 = vpack.c.bf16 %v141, %v139
    %v174 = vld [vmem:[#allocation5] sm:$0xf]
    %v175 = vld [vmem:[#allocation5 + $0x4] sm:$0xf]
    %v176 = vld [vmem:[#allocation5 + $0x8] sm:$0xf]
    %v177 = vld [vmem:[#allocation5 + $0xc] sm:$0xf]
    %v178 = vld [vmem:[#allocation5 + $0x10] sm:$0xf]
    %v179 = vld [vmem:[#allocation5 + $0x14] sm:$0xf]
    %v180 = vld [vmem:[#allocation5 + $0x18] sm:$0xf]
    %v181 = vld [vmem:[#allocation5 + $0x1c] sm:$0xf]
    %v182 = vld [vmem:[#allocation5 + $0x20] sm:$0xf]
    %v183 = vld [vmem:[#allocation5 + $0x24] sm:$0xf]
    %v184 = vld [vmem:[#allocation5 + $0x28] sm:$0xf]
    %v185 = vld [vmem:[#allocation5 + $0x2c] sm:$0xf]
    %v186 = vld [vmem:[#allocation5 + $0x30] sm:$0xf]
    %v187 = vld [vmem:[#allocation5 + $0x34] sm:$0xf]
    %v188 = vld [vmem:[#allocation5 + $0x38] sm:$0xf]
    %v189 = vld [vmem:[#allocation5 + $0x3c] sm:$0xf]
    %v190 = vld [vmem:[#allocation5 + $0x40] sm:$0xf]
    %v191 = vld [vmem:[#allocation5 + $0x44] sm:$0xf]
    %v192 = vld [vmem:[#allocation5 + $0x48] sm:$0xf]
    %v193 = vld [vmem:[#allocation5 + $0x4c] sm:$0xf]
    %v194 = vld [vmem:[#allocation5 + $0x50] sm:$0xf]
    %v195 = vld [vmem:[#allocation5 + $0x54] sm:$0xf]
    %v196 = vld [vmem:[#allocation5 + $0x58] sm:$0xf]
    %v197 = vld [vmem:[#allocation5 + $0x5c] sm:$0xf]
    %v198 = vld [vmem:[#allocation5 + $0x60] sm:$0xf]
    %v199 = vld [vmem:[#allocation5 + $0x64] sm:$0xf]
    %v200 = vld [vmem:[#allocation5 + $0x68] sm:$0xf]
    %v201 = vld [vmem:[#allocation5 + $0x6c] sm:$0xf]
    %v202 = vld [vmem:[#allocation5 + $0x70] sm:$0xf]
    %v203 = vld [vmem:[#allocation5 + $0x74] sm:$0xf]
    %v204 = vld [vmem:[#allocation5 + $0x78] sm:$0xf]
    %v205 = vld [vmem:[#allocation5 + $0x7c] sm:$0xf]
    %v238 = vunpack.c.l.b16 %v174
    %v239 = vunpack.c.l.b16 %v175
    %v240 = vunpack.c.l.b16 %v176
    %v241 = vunpack.c.l.b16 %v177
    %v242 = vunpack.c.l.b16 %v178
    %v243 = vunpack.c.l.b16 %v179
    %v244 = vunpack.c.l.b16 %v180
    %v245 = vunpack.c.l.b16 %v181
    %v246 = vunpack.c.l.b16 %v182
    %v247 = vunpack.c.l.b16 %v183
    %v248 = vunpack.c.l.b16 %v184
    %v249 = vunpack.c.l.b16 %v185
    %v250 = vunpack.c.l.b16 %v186
    %v251 = vunpack.c.l.b16 %v187
    %v252 = vunpack.c.l.b16 %v188
    %v253 = vunpack.c.l.b16 %v189
    %v254 = vunpack.c.l.b16 %v190
    %v255 = vunpack.c.l.b16 %v191
    %v256 = vunpack.c.l.b16 %v192
    %v257 = vunpack.c.l.b16 %v193
    %v258 = vunpack.c.l.b16 %v194
    %v259 = vunpack.c.l.b16 %v195
    %v260 = vunpack.c.l.b16 %v196
    %v261 = vunpack.c.l.b16 %v197
    %v262 = vunpack.c.l.b16 %v198
    %v263 = vunpack.c.l.b16 %v199
    %v264 = vunpack.c.l.b16 %v200
    %v265 = vunpack.c.l.b16 %v201
    %v266 = vunpack.c.l.b16 %v202
    %v267 = vunpack.c.l.b16 %v203
    %v268 = vunpack.c.l.b16 %v204
    %v269 = vunpack.c.l.b16 %v205
    %v270 = vpack.c.b16 %v239, %v238
    %v271 = vpack.c.b16 %v241, %v240
    %v272 = vpack.c.b16 %v243, %v242
    %v273 = vpack.c.b16 %v245, %v244
    %v274 = vpack.c.b16 %v247, %v246
    %v275 = vpack.c.b16 %v249, %v248
    %v276 = vpack.c.b16 %v251, %v250
    %v277 = vpack.c.b16 %v253, %v252
    %v278 = vpack.c.b16 %v255, %v254
    %v279 = vpack.c.b16 %v257, %v256
    %v280 = vpack.c.b16 %v259, %v258
    %v281 = vpack.c.b16 %v261, %v260
    %v282 = vpack.c.b16 %v263, %v262
    %v283 = vpack.c.b16 %v265, %v264
    %v284 = vpack.c.b16 %v267, %v266
    %v285 = vpack.c.b16 %v269, %v268
    %302 = vmatprep.subr.bf16.mxu0 0
    %303 = vmatpush1.bf16.msra.mxu0 %v270
    %304 = vmatprep.subr.bf16.mxu0 0
    %305 = vmatpush1.bf16.msra.mxu0 %v271
    %306 = vmatprep.subr.bf16.mxu0 0
    %307 = vmatpush1.bf16.msra.mxu0 %v272
    %308 = vmatprep.subr.bf16.mxu0 0
    %309 = vmatpush1.bf16.msra.mxu0 %v273
    %310 = vmatprep.subr.bf16.mxu0 0
    %311 = vmatpush1.bf16.msra.mxu0 %v274
    %312 = vmatprep.subr.bf16.mxu0 0
    %313 = vmatpush1.bf16.msra.mxu0 %v275
    %314 = vmatprep.subr.bf16.mxu0 0
    %315 = vmatpush1.bf16.msra.mxu0 %v276
    %316 = vmatprep.subr.bf16.mxu0 0
    %317 = vmatpush1.bf16.msra.mxu0 %v277
    %318 = vmatprep.subr.bf16.mxu0 0
    %319 = vmatpush1.bf16.msra.mxu0 %v278
    %320 = vmatprep.subr.bf16.mxu0 0
    %321 = vmatpush1.bf16.msra.mxu0 %v279
    %322 = vmatprep.subr.bf16.mxu0 0
    %323 = vmatpush1.bf16.msra.mxu0 %v280
    %324 = vmatprep.subr.bf16.mxu0 0
    %325 = vmatpush1.bf16.msra.mxu0 %v281
    %326 = vmatprep.subr.bf16.mxu0 0
    %327 = vmatpush1.bf16.msra.mxu0 %v282
    %328 = vmatprep.subr.bf16.mxu0 0
    %329 = vmatpush1.bf16.msra.mxu0 %v283
    %330 = vmatprep.subr.bf16.mxu0 0
    %331 = vmatpush1.bf16.msra.mxu0 %v284
    %332 = vmatprep.subr.bf16.mxu0 0
    %333 = vmatpush1.bf16.msra.mxu0 %v285
    %334 = vmatprep.mubr.bf16.mxu0 %v143
    %335 = vmatmul.mubr.bf16.gmra.mrb[0].mxu0 %v142
    %v336 = vpop.f32.mrb[0].mxu0
    %v337 = vadd.f32 0.0, %v336
    %v338 = vpop.f32.mrb[0].mxu0
    %v339 = vpop.f32.mrb[0].mxu0
    %v340 = vadd.f32 0.0, %v339
    %v341 = vpop.f32.mrb[0].mxu0
    %342 = vmatprep.mubr.bf16.mxu0 %v145
    %343 = vmatmul.mubr.bf16.gmra.mrb[0].mxu0 %v144
    %v344 = vpop.f32.mrb[0].mxu0
    %v345 = vadd.f32 0.0, %v344
    %v346 = vpop.f32.mrb[0].mxu0
    %v347 = vpop.f32.mrb[0].mxu0
    %v348 = vadd.f32 0.0, %v347
    %v349 = vpop.f32.mrb[0].mxu0
    %350 = vmatprep.mubr.bf16.mxu0 %v147
    %351 = vmatmul.mubr.bf16.gmra.mrb[0].mxu0 %v146
    %v352 = vpop.f32.mrb[0].mxu0
    %v353 = vadd.f32 0.0, %v352
    %v354 = vpop.f32.mrb[0].mxu0
    %v355 = vpop.f32.mrb[0].mxu0
    %v356 = vadd.f32 0.0, %v355
    %v357 = vpop.f32.mrb[0].mxu0
    %358 = vmatprep.mubr.bf16.mxu0 %v149
    %359 = vmatmul.mubr.bf16.gmra.mrb[0].mxu0 %v148
    %v360 = vpop.f32.mrb[0].mxu0
    %v361 = vadd.f32 0.0, %v360
    %v362 = vpop.f32.mrb[0].mxu0
    %v363 = vpop.f32.mrb[0].mxu0
    %v364 = vadd.f32 0.0, %v363
    %v365 = vpop.f32.mrb[0].mxu0
    %366 = vmatprep.mubr.bf16.mxu0 %v151
    %367 = vmatmul.mubr.bf16.gmra.mrb[0].mxu0 %v150
    %v368 = vpop.f32.mrb[0].mxu0
    %v369 = vadd.f32 0.0, %v368
    %v370 = vpop.f32.mrb[0].mxu0
    %v371 = vpop.f32.mrb[0].mxu0
    %v372 = vadd.f32 0.0, %v371
    %v373 = vpop.f32.mrb[0].mxu0
    %374 = vmatprep.mubr.bf16.mxu0 %v153
    %375 = vmatmul.mubr.bf16.gmra.mrb[0].mxu0 %v152
    %v376 = vpop.f32.mrb[0].mxu0
    %v377 = vadd.f32 0.0, %v376
    %v378 = vpop.f32.mrb[0].mxu0
    %v379 = vpop.f32.mrb[0].mxu0
    %v380 = vadd.f32 0.0, %v379
    %v381 = vpop.f32.mrb[0].mxu0
    %382 = vmatprep.mubr.bf16.mxu0 %v155
    %383 = vmatmul.mubr.bf16.gmra.mrb[0].mxu0 %v154
    %v384 = vpop.f32.mrb[0].mxu0
    %v385 = vadd.f32 0.0, %v384
    %v386 = vpop.f32.mrb[0].mxu0
    %v387 = vpop.f32.mrb[0].mxu0
    %v388 = vadd.f32 0.0, %v387
    %v389 = vpop.f32.mrb[0].mxu0
    %390 = vmatprep.mubr.bf16.mxu0 %v157
    %391 = vmatmul.mubr.bf16.gmra.mrb[0].mxu0 %v156
    %v392 = vpop.f32.mrb[0].mxu0
    %v393 = vadd.f32 0.0, %v392
    %v394 = vpop.f32.mrb[0].mxu0
    %v395 = vpop.f32.mrb[0].mxu0
    %v396 = vadd.f32 0.0, %v395
    %v397 = vpop.f32.mrb[0].mxu0
    %398 = vmatprep.mubr.bf16.mxu0 %v159
    %399 = vmatmul.mubr.bf16.gmra.mrb[0].mxu0 %v158
    %v400 = vpop.f32.mrb[0].mxu0
    %v401 = vadd.f32 0.0, %v400
    %v402 = vpop.f32.mrb[0].mxu0
    %v403 = vpop.f32.mrb[0].mxu0
    %v404 = vadd.f32 0.0, %v403
    %v405 = vpop.f32.mrb[0].mxu0
    %406 = vmatprep.mubr.bf16.mxu0 %v161
    %407 = vmatmul.mubr.bf16.gmra.mrb[0].mxu0 %v160
    %v408 = vpop.f32.mrb[0].mxu0
    %v409 = vadd.f32 0.0, %v408
    %v410 = vpop.f32.mrb[0].mxu0
    %v411 = vpop.f32.mrb[0].mxu0
    %v412 = vadd.f32 0.0, %v411
    %v413 = vpop.f32.mrb[0].mxu0
    %414 = vmatprep.mubr.bf16.mxu0 %v163
    %415 = vmatmul.mubr.bf16.gmra.mrb[0].mxu0 %v162
    %v416 = vpop.f32.mrb[0].mxu0
    %v417 = vadd.f32 0.0, %v416
    %v418 = vpop.f32.mrb[0].mxu0
    %v419 = vpop.f32.mrb[0].mxu0
    %v420 = vadd.f32 0.0, %v419
    %v421 = vpop.f32.mrb[0].mxu0
    %422 = vmatprep.mubr.bf16.mxu0 %v165
    %423 = vmatmul.mubr.bf16.gmra.mrb[0].mxu0 %v164
    %v424 = vpop.f32.mrb[0].mxu0
    %v425 = vadd.f32 0.0, %v424
    %v426 = vpop.f32.mrb[0].mxu0
    %v427 = vpop.f32.mrb[0].mxu0
    %v428 = vadd.f32 0.0, %v427
    %v429 = vpop.f32.mrb[0].mxu0
    %430 = vmatprep.mubr.bf16.mxu0 %v167
    %431 = vmatmul.mubr.bf16.gmra.mrb[0].mxu0 %v166
    %v432 = vpop.f32.mrb[0].mxu0
    %v433 = vadd.f32 0.0, %v432
    %v434 = vpop.f32.mrb[0].mxu0
    %v435 = vpop.f32.mrb[0].mxu0
    %v436 = vadd.f32 0.0, %v435
    %v437 = vpop.f32.mrb[0].mxu0
    %438 = vmatprep.mubr.bf16.mxu0 %v169
    %439 = vmatmul.mubr.bf16.gmra.mrb[0].mxu0 %v168
    %v440 = vpop.f32.mrb[0].mxu0
    %v441 = vadd.f32 0.0, %v440
    %v442 = vpop.f32.mrb[0].mxu0
    %v443 = vpop.f32.mrb[0].mxu0
    %v444 = vadd.f32 0.0, %v443
    %v445 = vpop.f32.mrb[0].mxu0
    %446 = vmatprep.mubr.bf16.mxu0 %v171
    %447 = vmatmul.mubr.bf16.gmra.mrb[0].mxu0 %v170
    %v448 = vpop.f32.mrb[0].mxu0
    %v449 = vadd.f32 0.0, %v448
    %v450 = vpop.f32.mrb[0].mxu0
    %v451 = vpop.f32.mrb[0].mxu0
    %v452 = vadd.f32 0.0, %v451
    %v453 = vpop.f32.mrb[0].mxu0
    %454 = vmatprep.mubr.bf16.mxu0 %v173
    %455 = vmatmul.mubr.bf16.gmra.mrb[0].mxu0 %v172
    %v456 = vpop.f32.mrb[0].mxu0
    %v457 = vadd.f32 0.0, %v456
    %v458 = vpop.f32.mrb[0].mxu0
    %v459 = vpop.f32.mrb[0].mxu0
    %v460 = vadd.f32 0.0, %v459
    %v461 = vpop.f32.mrb[0].mxu0
    %462 = vdwg.mxu0
    %v463 = vadd.f32 %v337, %v340
    %v464 = vadd.f32 %v463, %v345
    %v465 = vadd.f32 %v464, %v348
    %v466 = vadd.f32 %v465, %v353
    %v467 = vadd.f32 %v466, %v356
    %v468 = vadd.f32 %v467, %v361
    %v469 = vadd.f32 %v468, %v364
    %v470 = vadd.f32 %v469, %v369
    %v471 = vadd.f32 %v470, %v372
    %v472 = vadd.f32 %v471, %v377
    %v473 = vadd.f32 %v472, %v380
    %v474 = vadd.f32 %v473, %v385
    %v475 = vadd.f32 %v474, %v388
    %v476 = vadd.f32 %v475, %v393
    %v477 = vadd.f32 %v476, %v396
    %v478 = vadd.f32 %v477, %v401
    %v479 = vadd.f32 %v478, %v404
    %v480 = vadd.f32 %v479, %v409
    %v481 = vadd.f32 %v480, %v412
    %v482 = vadd.f32 %v481, %v417
    %v483 = vadd.f32 %v482, %v420
    %v484 = vadd.f32 %v483, %v425
    %v485 = vadd.f32 %v484, %v428
    %v486 = vadd.f32 %v485, %v433
    %v487 = vadd.f32 %v486, %v436
    %v488 = vadd.f32 %v487, %v441
    %v489 = vadd.f32 %v488, %v444
    %v490 = vadd.f32 %v489, %v449
    %v491 = vadd.f32 %v490, %v452
    %v492 = vadd.f32 %v491, %v457
    %v493 = vadd.f32 %v492, %v460
    %v494 = vrot.slane %v493, 4
    %v495 = vadd.f32 %v493, %v494
    %v496 = vrot.slane %v495, 2
    %v497 = vadd.f32 %v495, %v496
    %v498 = vrot.slane %v497, 1
    %v499 = vadd.f32 %v497, %v498
    %v500 = vrcp.pop 256.0
    %v501 = vmul.f32 %v499, %v500
    %v502 = vmul.f32 %v337, %v337
    %v503 = vmul.f32 %v340, %v340
    %v504 = vmul.f32 %v345, %v345
    %v505 = vmul.f32 %v348, %v348
    %v506 = vmul.f32 %v353, %v353
    %v507 = vmul.f32 %v356, %v356
    %v508 = vmul.f32 %v361, %v361
    %v509 = vmul.f32 %v364, %v364
    %v510 = vmul.f32 %v369, %v369
    %v511 = vmul.f32 %v372, %v372
    %v512 = vmul.f32 %v377, %v377
    %v513 = vmul.f32 %v380, %v380
    %v514 = vmul.f32 %v385, %v385
    %v515 = vmul.f32 %v388, %v388
    %v516 = vmul.f32 %v393, %v393
    %v517 = vmul.f32 %v396, %v396
    %v518 = vmul.f32 %v401, %v401
    %v519 = vmul.f32 %v404, %v404
    %v520 = vmul.f32 %v409, %v409
    %v521 = vmul.f32 %v412, %v412
    %v522 = vmul.f32 %v417, %v417
    %v523 = vmul.f32 %v420, %v420
    %v524 = vmul.f32 %v425, %v425
    %v525 = vmul.f32 %v428, %v428
    %v526 = vmul.f32 %v433, %v433
    %v527 = vmul.f32 %v436, %v436
    %v528 = vmul.f32 %v441, %v441
    %v529 = vmul.f32 %v444, %v444
    %v530 = vmul.f32 %v449, %v449
    %v531 = vmul.f32 %v452, %v452
    %v532 = vmul.f32 %v457, %v457
    %v533 = vmul.f32 %v460, %v460
    %v534 = vadd.f32 %v502, %v503
    %v535 = vadd.f32 %v534, %v504
    %v536 = vadd.f32 %v535, %v505
    %v537 = vadd.f32 %v536, %v506
    %v538 = vadd.f32 %v537, %v507
    %v539 = vadd.f32 %v538, %v508
    %v540 = vadd.f32 %v539, %v509
    %v541 = vadd.f32 %v540, %v510
    %v542 = vadd.f32 %v541, %v511
    %v543 = vadd.f32 %v542, %v512
    %v544 = vadd.f32 %v543, %v513
    %v545 = vadd.f32 %v544, %v514
    %v546 = vadd.f32 %v545, %v515
    %v547 = vadd.f32 %v546, %v516
    %v548 = vadd.f32 %v547, %v517
    %v549 = vadd.f32 %v548, %v518
    %v550 = vadd.f32 %v549, %v519
    %v551 = vadd.f32 %v550, %v520
    %v552 = vadd.f32 %v551, %v521
    %v553 = vadd.f32 %v552, %v522
    %v554 = vadd.f32 %v553, %v523
    %v555 = vadd.f32 %v554, %v524
    %v556 = vadd.f32 %v555, %v525
    %v557 = vadd.f32 %v556, %v526
    %v558 = vadd.f32 %v557, %v527
    %v559 = vadd.f32 %v558, %v528
    %v560 = vadd.f32 %v559, %v529
    %v561 = vadd.f32 %v560, %v530
    %v562 = vadd.f32 %v561, %v531
    %v563 = vadd.f32 %v562, %v532
    %v564 = vadd.f32 %v563, %v533
    %v565 = vrot.slane %v564, 4
    %v566 = vadd.f32 %v564, %v565
    %v567 = vrot.slane %v566, 2
    %v568 = vadd.f32 %v566, %v567
    %v569 = vrot.slane %v568, 1
    %v570 = vadd.f32 %v568, %v569
    %v571 = vmul.f32 %v570, %v500
    %v572 = vmul.f32 %v501, %v501
    %v573 = vsub.f32 %v571, %v572
    %v574 = vmax.f32 %v573, 0.0
    %v575 = vadd.f32 %v574, 1e-05
    %v576 = vrsqrt.pop %v575
    %v577 = vmul.f32 %v77, %v576
    %v578 = vmul.f32 %v501, %v577
    %v581 = vunpack.c.l.s4 1983009808
    %v582 = vunpack.c.0.s8 %v581
    %v583 = vlaneseq
    %v584 = vshrl.u32 %v583, 7
    %v585 = vsub.s32 %v582, %v584
    %v586 = vrot.slane %v578, %v585
    %v587 = vrot.slane %v586, 7
    %v589 = vsub.f32 %v77, %v587
    %v590 = vlaneseq
    %v591 = vshrl.u32 %v590, 7
    %v592 = vsub.s32 0, %v591
    %v593 = vrot.slane %v577, %v592
    %v594 = vmul.f32 %v337, %v593
    %v595 = vmul.f32 %v340, %v593
    %v596 = vmul.f32 %v345, %v593
    %v597 = vmul.f32 %v348, %v593
    %v598 = vmul.f32 %v353, %v593
    %v599 = vmul.f32 %v356, %v593
    %v600 = vmul.f32 %v361, %v593
    %v601 = vmul.f32 %v364, %v593
    %v602 = vmul.f32 %v369, %v593
    %v603 = vmul.f32 %v372, %v593
    %v604 = vmul.f32 %v377, %v593
    %v605 = vmul.f32 %v380, %v593
    %v606 = vmul.f32 %v385, %v593
    %v607 = vmul.f32 %v388, %v593
    %v608 = vmul.f32 %v393, %v593
    %v609 = vmul.f32 %v396, %v593
    %v610 = vmul.f32 %v401, %v593
    %v611 = vmul.f32 %v404, %v593
    %v612 = vmul.f32 %v409, %v593
    %v613 = vmul.f32 %v412, %v593
    %v614 = vmul.f32 %v417, %v593
    %v615 = vmul.f32 %v420, %v593
    %v616 = vmul.f32 %v425, %v593
    %v617 = vmul.f32 %v428, %v593
    %v618 = vmul.f32 %v433, %v593
    %v619 = vmul.f32 %v436, %v593
    %v620 = vmul.f32 %v441, %v593
    %v621 = vmul.f32 %v444, %v593
    %v622 = vmul.f32 %v449, %v593
    %v623 = vmul.f32 %v452, %v593
    %v624 = vmul.f32 %v457, %v593
    %v625 = vmul.f32 %v460, %v593
    %v626 = vlaneseq
    %v627 = vshrl.u32 %v626, 7
    %v628 = vsub.s32 1, %v627
    %v629 = vrot.slane %v589, %v628
    %v630 = vadd.f32 %v594, %v629
    %v631 = vadd.f32 %v595, %v629
    %v632 = vadd.f32 %v596, %v629
    %v633 = vadd.f32 %v597, %v629
    %v634 = vadd.f32 %v598, %v629
    %v635 = vadd.f32 %v599, %v629
    %v636 = vadd.f32 %v600, %v629
    %v637 = vadd.f32 %v601, %v629
    %v638 = vadd.f32 %v602, %v629
    %v639 = vadd.f32 %v603, %v629
    %v640 = vadd.f32 %v604, %v629
    %v641 = vadd.f32 %v605, %v629
    %v642 = vadd.f32 %v606, %v629
    %v643 = vadd.f32 %v607, %v629
    %v644 = vadd.f32 %v608, %v629
    %v645 = vadd.f32 %v609, %v629
    %v646 = vadd.f32 %v610, %v629
    %v647 = vadd.f32 %v611, %v629
    %v648 = vadd.f32 %v612, %v629
    %v649 = vadd.f32 %v613, %v629
    %v650 = vadd.f32 %v614, %v629
    %v651 = vadd.f32 %v615, %v629
    %v652 = vadd.f32 %v616, %v629
    %v653 = vadd.f32 %v617, %v629
    %v654 = vadd.f32 %v618, %v629
    %v655 = vadd.f32 %v619, %v629
    %v656 = vadd.f32 %v620, %v629
    %v657 = vadd.f32 %v621, %v629
    %v658 = vadd.f32 %v622, %v629
    %v659 = vadd.f32 %v623, %v629
    %v660 = vadd.f32 %v624, %v629
    %v661 = vadd.f32 %v625, %v629
    %v662 = vmax.f32 %v630, 0.0
    %v663 = vmax.f32 %v631, 0.0
    %v664 = vmax.f32 %v632, 0.0
    %v665 = vmax.f32 %v633, 0.0
    %v666 = vmax.f32 %v634, 0.0
    %v667 = vmax.f32 %v635, 0.0
    %v668 = vmax.f32 %v636, 0.0
    %v669 = vmax.f32 %v637, 0.0
    %v670 = vmax.f32 %v638, 0.0
    %v671 = vmax.f32 %v639, 0.0
    %v672 = vmax.f32 %v640, 0.0
    %v673 = vmax.f32 %v641, 0.0
    %v674 = vmax.f32 %v642, 0.0
    %v675 = vmax.f32 %v643, 0.0
    %v676 = vmax.f32 %v644, 0.0
    %v677 = vmax.f32 %v645, 0.0
    %v678 = vmax.f32 %v646, 0.0
    %v679 = vmax.f32 %v647, 0.0
    %v680 = vmax.f32 %v648, 0.0
    %v681 = vmax.f32 %v649, 0.0
    %v682 = vmax.f32 %v650, 0.0
    %v683 = vmax.f32 %v651, 0.0
    %v684 = vmax.f32 %v652, 0.0
    %v685 = vmax.f32 %v653, 0.0
    %v686 = vmax.f32 %v654, 0.0
    %v687 = vmax.f32 %v655, 0.0
    %v688 = vmax.f32 %v656, 0.0
    %v689 = vmax.f32 %v657, 0.0
    %v690 = vmax.f32 %v658, 0.0
    %v691 = vmax.f32 %v659, 0.0
    %v692 = vmax.f32 %v660, 0.0
    %v693 = vmax.f32 %v661, 0.0
    %v694 = vpack.c.bf16 %v663, %v662
    %v695 = vpack.c.bf16 %v665, %v664
    %v696 = vpack.c.bf16 %v667, %v666
    %v697 = vpack.c.bf16 %v669, %v668
    %v698 = vpack.c.bf16 %v671, %v670
    %v699 = vpack.c.bf16 %v673, %v672
    %v700 = vpack.c.bf16 %v675, %v674
    %v701 = vpack.c.bf16 %v677, %v676
    %v702 = vpack.c.bf16 %v679, %v678
    %v703 = vpack.c.bf16 %v681, %v680
    %v704 = vpack.c.bf16 %v683, %v682
    %v705 = vpack.c.bf16 %v685, %v684
    %v706 = vpack.c.bf16 %v687, %v686
    %v707 = vpack.c.bf16 %v689, %v688
    %v708 = vpack.c.bf16 %v691, %v690
    %v709 = vpack.c.bf16 %v693, %v692
    %v710 = vld [vmem:[#allocation7] sm:$0xf]
    %v711 = vld [vmem:[#allocation7 + $0x4] sm:$0xf]
    %v712 = vld [vmem:[#allocation7 + $0x8] sm:$0xf]
    %v713 = vld [vmem:[#allocation7 + $0xc] sm:$0xf]
    %v714 = vld [vmem:[#allocation7 + $0x10] sm:$0xf]
    %v715 = vld [vmem:[#allocation7 + $0x14] sm:$0xf]
    %v716 = vld [vmem:[#allocation7 + $0x18] sm:$0xf]
    %v717 = vld [vmem:[#allocation7 + $0x1c] sm:$0xf]
    %v718 = vld [vmem:[#allocation7 + $0x20] sm:$0xf]
    %v719 = vld [vmem:[#allocation7 + $0x24] sm:$0xf]
    %v720 = vld [vmem:[#allocation7 + $0x28] sm:$0xf]
    %v721 = vld [vmem:[#allocation7 + $0x2c] sm:$0xf]
    %v722 = vld [vmem:[#allocation7 + $0x30] sm:$0xf]
    %v723 = vld [vmem:[#allocation7 + $0x34] sm:$0xf]
    %v724 = vld [vmem:[#allocation7 + $0x38] sm:$0xf]
    %v725 = vld [vmem:[#allocation7 + $0x3c] sm:$0xf]
    %v742 = vunpack.c.l.b16 %v710
    %v743 = vunpack.c.l.b16 %v711
    %v744 = vunpack.c.l.b16 %v712
    %v745 = vunpack.c.l.b16 %v713
    %v746 = vunpack.c.l.b16 %v714
    %v747 = vunpack.c.l.b16 %v715
    %v748 = vunpack.c.l.b16 %v716
    %v749 = vunpack.c.l.b16 %v717
    %v750 = vunpack.c.l.b16 %v718
    %v751 = vunpack.c.l.b16 %v719
    %v752 = vunpack.c.l.b16 %v720
    %v753 = vunpack.c.l.b16 %v721
    %v754 = vunpack.c.l.b16 %v722
    %v755 = vunpack.c.l.b16 %v723
    %v756 = vunpack.c.l.b16 %v724
    %v757 = vunpack.c.l.b16 %v725
    %v758 = vpack.c.b16 %v743, %v742
    %v759 = vpack.c.b16 %v745, %v744
    %v760 = vpack.c.b16 %v747, %v746
    %v761 = vpack.c.b16 %v749, %v748
    %v762 = vpack.c.b16 %v751, %v750
    %v763 = vpack.c.b16 %v753, %v752
    %v764 = vpack.c.b16 %v755, %v754
    %v765 = vpack.c.b16 %v757, %v756
    %774 = vmatprep.subr.bf16.mxu0 0
    %775 = vmatpush1.bf16.msra.mxu0 %v758
    %776 = vmatprep.subr.bf16.mxu0 0
    %777 = vmatpush1.bf16.msra.mxu0 %v759
    %778 = vmatprep.subr.bf16.mxu0 0
    %779 = vmatpush1.bf16.msra.mxu0 %v760
    %780 = vmatprep.subr.bf16.mxu0 0
    %781 = vmatpush1.bf16.msra.mxu0 %v761
    %782 = vmatprep.subr.bf16.mxu0 0
    %783 = vmatpush1.bf16.msra.mxu0 %v762
    %784 = vmatprep.subr.bf16.mxu0 0
    %785 = vmatpush1.bf16.msra.mxu0 %v763
    %786 = vmatprep.subr.bf16.mxu0 0
    %787 = vmatpush1.bf16.msra.mxu0 %v764
    %788 = vmatprep.subr.bf16.mxu0 0
    %789 = vmatpush1.bf16.msra.mxu0 %v765
    %790 = vmatprep.subr.bf16.mxu0 0
    %791 = vmatpush1.bf16.msra.mxu0 0
    %792 = vmatprep.subr.bf16.mxu0 0
    %793 = vmatpush1.bf16.msra.mxu0 0
    %794 = vmatprep.subr.bf16.mxu0 0
    %795 = vmatpush1.bf16.msra.mxu0 0
    %796 = vmatprep.subr.bf16.mxu0 0
    %797 = vmatpush1.bf16.msra.mxu0 0
    %798 = vmatprep.subr.bf16.mxu0 0
    %799 = vmatpush1.bf16.msra.mxu0 0
    %800 = vmatprep.subr.bf16.mxu0 0
    %801 = vmatpush1.bf16.msra.mxu0 0
    %802 = vmatprep.subr.bf16.mxu0 0
    %803 = vmatpush1.bf16.msra.mxu0 0
    %804 = vmatprep.subr.bf16.mxu0 0
    %805 = vmatpush1.bf16.msra.mxu0 0
    %806 = vmatprep.mubr.bf16.mxu0 0
    %807 = vmatmul.mubr.bf16.gmra.mrb[0].mxu0 %v694
    %v808 = vpop.f32.mrb[0].mxu0
    %v809 = vadd.f32 0.0, %v808
    %v810 = vpop.f32.mrb[0].mxu0
    %v811 = vpop.f32.mrb[0].mxu0
    %v812 = vadd.f32 0.0, %v811
    %v813 = vpop.f32.mrb[0].mxu0
    %814 = vmatprep.mubr.bf16.mxu0 0
    %815 = vmatmul.mubr.bf16.gmra.mrb[0].mxu0 %v695
    %v816 = vpop.f32.mrb[0].mxu0
    %v817 = vadd.f32 0.0, %v816
    %v818 = vpop.f32.mrb[0].mxu0
    %v819 = vpop.f32.mrb[0].mxu0
    %v820 = vadd.f32 0.0, %v819
    %v821 = vpop.f32.mrb[0].mxu0
    %822 = vmatprep.mubr.bf16.mxu0 0
    %823 = vmatmul.mubr.bf16.gmra.mrb[0].mxu0 %v696
    %v824 = vpop.f32.mrb[0].mxu0
    %v825 = vadd.f32 0.0, %v824
    %v826 = vpop.f32.mrb[0].mxu0
    %v827 = vpop.f32.mrb[0].mxu0
    %v828 = vadd.f32 0.0, %v827
    %v829 = vpop.f32.mrb[0].mxu0
    %830 = vmatprep.mubr.bf16.mxu0 0
    %831 = vmatmul.mubr.bf16.gmra.mrb[0].mxu0 %v697
    %v832 = vpop.f32.mrb[0].mxu0
    %v833 = vadd.f32 0.0, %v832
    %v834 = vpop.f32.mrb[0].mxu0
    %v835 = vpop.f32.mrb[0].mxu0
    %v836 = vadd.f32 0.0, %v835
    %v837 = vpop.f32.mrb[0].mxu0
    %838 = vmatprep.mubr.bf16.mxu0 0
    %839 = vmatmul.mubr.bf16.gmra.mrb[0].mxu0 %v698
    %v840 = vpop.f32.mrb[0].mxu0
    %v841 = vadd.f32 0.0, %v840
    %v842 = vpop.f32.mrb[0].mxu0
    %v843 = vpop.f32.mrb[0].mxu0
    %v844 = vadd.f32 0.0, %v843
    %v845 = vpop.f32.mrb[0].mxu0
    %846 = vmatprep.mubr.bf16.mxu0 0
    %847 = vmatmul.mubr.bf16.gmra.mrb[0].mxu0 %v699
    %v848 = vpop.f32.mrb[0].mxu0
    %v849 = vadd.f32 0.0, %v848
    %v850 = vpop.f32.mrb[0].mxu0
    %v851 = vpop.f32.mrb[0].mxu0
    %v852 = vadd.f32 0.0, %v851
    %v853 = vpop.f32.mrb[0].mxu0
    %854 = vmatprep.mubr.bf16.mxu0 0
    %855 = vmatmul.mubr.bf16.gmra.mrb[0].mxu0 %v700
    %v856 = vpop.f32.mrb[0].mxu0
    %v857 = vadd.f32 0.0, %v856
    %v858 = vpop.f32.mrb[0].mxu0
    %v859 = vpop.f32.mrb[0].mxu0
    %v860 = vadd.f32 0.0, %v859
    %v861 = vpop.f32.mrb[0].mxu0
    %862 = vmatprep.mubr.bf16.mxu0 0
    %863 = vmatmul.mubr.bf16.gmra.mrb[0].mxu0 %v701
    %v864 = vpop.f32.mrb[0].mxu0
    %v865 = vadd.f32 0.0, %v864
    %v866 = vpop.f32.mrb[0].mxu0
    %v867 = vpop.f32.mrb[0].mxu0
    %v868 = vadd.f32 0.0, %v867
    %v869 = vpop.f32.mrb[0].mxu0
    %870 = vmatprep.mubr.bf16.mxu0 0
    %871 = vmatmul.mubr.bf16.gmra.mrb[0].mxu0 %v702
    %v872 = vpop.f32.mrb[0].mxu0
    %v873 = vadd.f32 0.0, %v872
    %v874 = vpop.f32.mrb[0].mxu0
    %v875 = vpop.f32.mrb[0].mxu0
    %v876 = vadd.f32 0.0, %v875
    %v877 = vpop.f32.mrb[0].mxu0
    %878 = vmatprep.mubr.bf16.mxu0 0
    %879 = vmatmul.mubr.bf16.gmra.mrb[0].mxu0 %v703
    %v880 = vpop.f32.mrb[0].mxu0
    %v881 = vadd.f32 0.0, %v880
    %v882 = vpop.f32.mrb[0].mxu0
    %v883 = vpop.f32.mrb[0].mxu0
    %v884 = vadd.f32 0.0, %v883
    %v885 = vpop.f32.mrb[0].mxu0
    %886 = vmatprep.mubr.bf16.mxu0 0
    %887 = vmatmul.mubr.bf16.gmra.mrb[0].mxu0 %v704
    %v888 = vpop.f32.mrb[0].mxu0
    %v889 = vadd.f32 0.0, %v888
    %v890 = vpop.f32.mrb[0].mxu0
    %v891 = vpop.f32.mrb[0].mxu0
    %v892 = vadd.f32 0.0, %v891
    %v893 = vpop.f32.mrb[0].mxu0
    %894 = vmatprep.mubr.bf16.mxu0 0
    %895 = vmatmul.mubr.bf16.gmra.mrb[0].mxu0 %v705
    %v896 = vpop.f32.mrb[0].mxu0
    %v897 = vadd.f32 0.0, %v896
    %v898 = vpop.f32.mrb[0].mxu0
    %v899 = vpop.f32.mrb[0].mxu0
    %v900 = vadd.f32 0.0, %v899
    %v901 = vpop.f32.mrb[0].mxu0
    %902 = vmatprep.mubr.bf16.mxu0 0
    %903 = vmatmul.mubr.bf16.gmra.mrb[0].mxu0 %v706
    %v904 = vpop.f32.mrb[0].mxu0
    %v905 = vadd.f32 0.0, %v904
    %v906 = vpop.f32.mrb[0].mxu0
    %v907 = vpop.f32.mrb[0].mxu0
    %v908 = vadd.f32 0.0, %v907
    %v909 = vpop.f32.mrb[0].mxu0
    %910 = vmatprep.mubr.bf16.mxu0 0
    %911 = vmatmul.mubr.bf16.gmra.mrb[0].mxu0 %v707
    %v912 = vpop.f32.mrb[0].mxu0
    %v913 = vadd.f32 0.0, %v912
    %v914 = vpop.f32.mrb[0].mxu0
    %v915 = vpop.f32.mrb[0].mxu0
    %v916 = vadd.f32 0.0, %v915
    %v917 = vpop.f32.mrb[0].mxu0
    %918 = vmatprep.mubr.bf16.mxu0 0
    %919 = vmatmul.mubr.bf16.gmra.mrb[0].mxu0 %v708
    %v920 = vpop.f32.mrb[0].mxu0
    %v921 = vadd.f32 0.0, %v920
    %v922 = vpop.f32.mrb[0].mxu0
    %v923 = vpop.f32.mrb[0].mxu0
    %v924 = vadd.f32 0.0, %v923
    %v925 = vpop.f32.mrb[0].mxu0
    %926 = vmatprep.mubr.bf16.mxu0 0
    %927 = vmatmul.mubr.bf16.gmra.mrb[0].mxu0 %v709
    %v928 = vpop.f32.mrb[0].mxu0
    %v929 = vadd.f32 0.0, %v928
    %v930 = vpop.f32.mrb[0].mxu0
    %v931 = vpop.f32.mrb[0].mxu0
    %v932 = vadd.f32 0.0, %v931
    %v933 = vpop.f32.mrb[0].mxu0
    %934 = vdwg.mxu0
    %v935 = vadd.f32 %v809, %v812
    %v936 = vadd.f32 %v935, %v817
    %v937 = vadd.f32 %v936, %v820
    %v938 = vadd.f32 %v937, %v825
    %v939 = vadd.f32 %v938, %v828
    %v940 = vadd.f32 %v939, %v833
    %v941 = vadd.f32 %v940, %v836
    %v942 = vadd.f32 %v941, %v841
    %v943 = vadd.f32 %v942, %v844
    %v944 = vadd.f32 %v943, %v849
    %v945 = vadd.f32 %v944, %v852
    %v946 = vadd.f32 %v945, %v857
    %v947 = vadd.f32 %v946, %v860
    %v948 = vadd.f32 %v947, %v865
    %v949 = vadd.f32 %v948, %v868
    %v950 = vadd.f32 %v949, %v873
    %v951 = vadd.f32 %v950, %v876
    %v952 = vadd.f32 %v951, %v881
    %v953 = vadd.f32 %v952, %v884
    %v954 = vadd.f32 %v953, %v889
    %v955 = vadd.f32 %v954, %v892
    %v956 = vadd.f32 %v955, %v897
    %v957 = vadd.f32 %v956, %v900
    %v958 = vadd.f32 %v957, %v905
    %v959 = vadd.f32 %v958, %v908
    %v960 = vadd.f32 %v959, %v913
    %v961 = vadd.f32 %v960, %v916
    %v962 = vadd.f32 %v961, %v921
    %v963 = vadd.f32 %v962, %v924
    %v964 = vadd.f32 %v963, %v929
    %v965 = vadd.f32 %v964, %v932
    %v966 = vrot.slane %v965, 4
    %v967 = vadd.f32 %v965, %v966
    %v968 = vrot.slane %v967, 2
    %v969 = vadd.f32 %v967, %v968
    %v970 = vrot.slane %v969, 1
    %v971 = vadd.f32 %v969, %v970
    %v972 = vmul.f32 %v971, %v500
    %v973 = vmul.f32 %v809, %v809
    %v974 = vmul.f32 %v812, %v812
    %v975 = vmul.f32 %v817, %v817
    %v976 = vmul.f32 %v820, %v820
    %v977 = vmul.f32 %v825, %v825
    %v978 = vmul.f32 %v828, %v828
    %v979 = vmul.f32 %v833, %v833
    %v980 = vmul.f32 %v836, %v836
    %v981 = vmul.f32 %v841, %v841
    %v982 = vmul.f32 %v844, %v844
    %v983 = vmul.f32 %v849, %v849
    %v984 = vmul.f32 %v852, %v852
    %v985 = vmul.f32 %v857, %v857
    %v986 = vmul.f32 %v860, %v860
    %v987 = vmul.f32 %v865, %v865
    %v988 = vmul.f32 %v868, %v868
    %v989 = vmul.f32 %v873, %v873
    %v990 = vmul.f32 %v876, %v876
    %v991 = vmul.f32 %v881, %v881
    %v992 = vmul.f32 %v884, %v884
    %v993 = vmul.f32 %v889, %v889
    %v994 = vmul.f32 %v892, %v892
    %v995 = vmul.f32 %v897, %v897
    %v996 = vmul.f32 %v900, %v900
    %v997 = vmul.f32 %v905, %v905
    %v998 = vmul.f32 %v908, %v908
    %v999 = vmul.f32 %v913, %v913
    %v1000 = vmul.f32 %v916, %v916
    %v1001 = vmul.f32 %v921, %v921
    %v1002 = vmul.f32 %v924, %v924
    %v1003 = vmul.f32 %v929, %v929
    %v1004 = vmul.f32 %v932, %v932
    %v1005 = vadd.f32 %v973, %v974
    %v1006 = vadd.f32 %v1005, %v975
    %v1007 = vadd.f32 %v1006, %v976
    %v1008 = vadd.f32 %v1007, %v977
    %v1009 = vadd.f32 %v1008, %v978
    %v1010 = vadd.f32 %v1009, %v979
    %v1011 = vadd.f32 %v1010, %v980
    %v1012 = vadd.f32 %v1011, %v981
    %v1013 = vadd.f32 %v1012, %v982
    %v1014 = vadd.f32 %v1013, %v983
    %v1015 = vadd.f32 %v1014, %v984
    %v1016 = vadd.f32 %v1015, %v985
    %v1017 = vadd.f32 %v1016, %v986
    %v1018 = vadd.f32 %v1017, %v987
    %v1019 = vadd.f32 %v1018, %v988
    %v1020 = vadd.f32 %v1019, %v989
    %v1021 = vadd.f32 %v1020, %v990
    %v1022 = vadd.f32 %v1021, %v991
    %v1023 = vadd.f32 %v1022, %v992
    %v1024 = vadd.f32 %v1023, %v993
    %v1025 = vadd.f32 %v1024, %v994
    %v1026 = vadd.f32 %v1025, %v995
    %v1027 = vadd.f32 %v1026, %v996
    %v1028 = vadd.f32 %v1027, %v997
    %v1029 = vadd.f32 %v1028, %v998
    %v1030 = vadd.f32 %v1029, %v999
    %v1031 = vadd.f32 %v1030, %v1000
    %v1032 = vadd.f32 %v1031, %v1001
    %v1033 = vadd.f32 %v1032, %v1002
    %v1034 = vadd.f32 %v1033, %v1003
    %v1035 = vadd.f32 %v1034, %v1004
    %v1036 = vrot.slane %v1035, 4
    %v1037 = vadd.f32 %v1035, %v1036
    %v1038 = vrot.slane %v1037, 2
    %v1039 = vadd.f32 %v1037, %v1038
    %v1040 = vrot.slane %v1039, 1
    %v1041 = vadd.f32 %v1039, %v1040
    %v1042 = vmul.f32 %v1041, %v500
    %v1043 = vmul.f32 %v972, %v972
    %v1044 = vsub.f32 %v1042, %v1043
    %v1045 = vmax.f32 %v1044, 0.0
    %v1046 = vadd.f32 %v1045, 1e-05
    %v1047 = vrsqrt.pop %v1046
    %v1049 = vrot.slane %v77, 2
    %v1051 = vmul.f32 %v1049, %v1047
    %v1052 = vmul.f32 %v972, %v1051
    %v1055 = vunpack.c.l.s4 1983009808
    %v1056 = vunpack.c.0.s8 %v1055
    %v1057 = vlaneseq
    %v1058 = vshrl.u32 %v1057, 7
    %v1059 = vsub.s32 %v1056, %v1058
    %v1060 = vrot.slane %v1052, %v1059
    %v1061 = vrot.slane %v1060, 7
    %v1063 = vsub.f32 %v1049, %v1061
    %v1064 = vlaneseq
    %v1065 = vshrl.u32 %v1064, 7
    %v1066 = vsub.s32 0, %v1065
    %v1067 = vrot.slane %v1051, %v1066
    %v1068 = vmul.f32 %v809, %v1067
    %v1069 = vmul.f32 %v812, %v1067
    %v1070 = vmul.f32 %v817, %v1067
    %v1071 = vmul.f32 %v820, %v1067
    %v1072 = vmul.f32 %v825, %v1067
    %v1073 = vmul.f32 %v828, %v1067
    %v1074 = vmul.f32 %v833, %v1067
    %v1075 = vmul.f32 %v836, %v1067
    %v1076 = vmul.f32 %v841, %v1067
    %v1077 = vmul.f32 %v844, %v1067
    %v1078 = vmul.f32 %v849, %v1067
    %v1079 = vmul.f32 %v852, %v1067
    %v1080 = vmul.f32 %v857, %v1067
    %v1081 = vmul.f32 %v860, %v1067
    %v1082 = vmul.f32 %v865, %v1067
    %v1083 = vmul.f32 %v868, %v1067
    %v1084 = vmul.f32 %v873, %v1067
    %v1085 = vmul.f32 %v876, %v1067
    %v1086 = vmul.f32 %v881, %v1067
    %v1087 = vmul.f32 %v884, %v1067
    %v1088 = vmul.f32 %v889, %v1067
    %v1089 = vmul.f32 %v892, %v1067
    %v1090 = vmul.f32 %v897, %v1067
    %v1091 = vmul.f32 %v900, %v1067
    %v1092 = vmul.f32 %v905, %v1067
    %v1093 = vmul.f32 %v908, %v1067
    %v1094 = vmul.f32 %v913, %v1067
    %v1095 = vmul.f32 %v916, %v1067
    %v1096 = vmul.f32 %v921, %v1067
    %v1097 = vmul.f32 %v924, %v1067
    %v1098 = vmul.f32 %v929, %v1067
    %v1099 = vmul.f32 %v932, %v1067
    %v1100 = vlaneseq
    %v1101 = vshrl.u32 %v1100, 7
    %v1102 = vsub.s32 1, %v1101
    %v1103 = vrot.slane %v1063, %v1102
    %v1104 = vadd.f32 %v1068, %v1103
    %v1105 = vadd.f32 %v1069, %v1103
    %v1106 = vadd.f32 %v1070, %v1103
    %v1107 = vadd.f32 %v1071, %v1103
    %v1108 = vadd.f32 %v1072, %v1103
    %v1109 = vadd.f32 %v1073, %v1103
    %v1110 = vadd.f32 %v1074, %v1103
    %v1111 = vadd.f32 %v1075, %v1103
    %v1112 = vadd.f32 %v1076, %v1103
    %v1113 = vadd.f32 %v1077, %v1103
    %v1114 = vadd.f32 %v1078, %v1103
    %v1115 = vadd.f32 %v1079, %v1103
    %v1116 = vadd.f32 %v1080, %v1103
    %v1117 = vadd.f32 %v1081, %v1103
    %v1118 = vadd.f32 %v1082, %v1103
    %v1119 = vadd.f32 %v1083, %v1103
    %v1120 = vadd.f32 %v1084, %v1103
    %v1121 = vadd.f32 %v1085, %v1103
    %v1122 = vadd.f32 %v1086, %v1103
    %v1123 = vadd.f32 %v1087, %v1103
    %v1124 = vadd.f32 %v1088, %v1103
    %v1125 = vadd.f32 %v1089, %v1103
    %v1126 = vadd.f32 %v1090, %v1103
    %v1127 = vadd.f32 %v1091, %v1103
    %v1128 = vadd.f32 %v1092, %v1103
    %v1129 = vadd.f32 %v1093, %v1103
    %v1130 = vadd.f32 %v1094, %v1103
    %v1131 = vadd.f32 %v1095, %v1103
    %v1132 = vadd.f32 %v1096, %v1103
    %v1133 = vadd.f32 %v1097, %v1103
    %v1134 = vadd.f32 %v1098, %v1103
    %v1135 = vadd.f32 %v1099, %v1103
    %v1136 = vmax.f32 %v1104, 0.0
    %v1137 = vmax.f32 %v1105, 0.0
    %v1138 = vmax.f32 %v1106, 0.0
    %v1139 = vmax.f32 %v1107, 0.0
    %v1140 = vmax.f32 %v1108, 0.0
    %v1141 = vmax.f32 %v1109, 0.0
    %v1142 = vmax.f32 %v1110, 0.0
    %v1143 = vmax.f32 %v1111, 0.0
    %v1144 = vmax.f32 %v1112, 0.0
    %v1145 = vmax.f32 %v1113, 0.0
    %v1146 = vmax.f32 %v1114, 0.0
    %v1147 = vmax.f32 %v1115, 0.0
    %v1148 = vmax.f32 %v1116, 0.0
    %v1149 = vmax.f32 %v1117, 0.0
    %v1150 = vmax.f32 %v1118, 0.0
    %v1151 = vmax.f32 %v1119, 0.0
    %v1152 = vmax.f32 %v1120, 0.0
    %v1153 = vmax.f32 %v1121, 0.0
    %v1154 = vmax.f32 %v1122, 0.0
    %v1155 = vmax.f32 %v1123, 0.0
    %v1156 = vmax.f32 %v1124, 0.0
    %v1157 = vmax.f32 %v1125, 0.0
    %v1158 = vmax.f32 %v1126, 0.0
    %v1159 = vmax.f32 %v1127, 0.0
    %v1160 = vmax.f32 %v1128, 0.0
    %v1161 = vmax.f32 %v1129, 0.0
    %v1162 = vmax.f32 %v1130, 0.0
    %v1163 = vmax.f32 %v1131, 0.0
    %v1164 = vmax.f32 %v1132, 0.0
    %v1165 = vmax.f32 %v1133, 0.0
    %v1166 = vmax.f32 %v1134, 0.0
    %v1167 = vmax.f32 %v1135, 0.0
    %v1168 = vpack.c.bf16 %v1137, %v1136
    %v1169 = vpack.c.bf16 %v1139, %v1138
    %v1170 = vpack.c.bf16 %v1141, %v1140
    %v1171 = vpack.c.bf16 %v1143, %v1142
    %v1172 = vpack.c.bf16 %v1145, %v1144
    %v1173 = vpack.c.bf16 %v1147, %v1146
    %v1174 = vpack.c.bf16 %v1149, %v1148
    %v1175 = vpack.c.bf16 %v1151, %v1150
    %v1176 = vpack.c.bf16 %v1153, %v1152
    %v1177 = vpack.c.bf16 %v1155, %v1154
    %v1178 = vpack.c.bf16 %v1157, %v1156
    %v1179 = vpack.c.bf16 %v1159, %v1158
    %v1180 = vpack.c.bf16 %v1161, %v1160
    %v1181 = vpack.c.bf16 %v1163, %v1162
    %v1182 = vpack.c.bf16 %v1165, %v1164
    %v1183 = vpack.c.bf16 %v1167, %v1166
    %v1184 = vld [vmem:[#allocation8] sm:$0xf]
    %v1185 = vld [vmem:[#allocation8 + $0x4] sm:$0xf]
    %v1186 = vld [vmem:[#allocation8 + $0x8] sm:$0xf]
    %v1187 = vld [vmem:[#allocation8 + $0xc] sm:$0xf]
    %v1188 = vld [vmem:[#allocation8 + $0x10] sm:$0xf]
    %v1189 = vld [vmem:[#allocation8 + $0x14] sm:$0xf]
    %v1190 = vld [vmem:[#allocation8 + $0x18] sm:$0xf]
    %v1191 = vld [vmem:[#allocation8 + $0x1c] sm:$0xf]
    %v1192 = vld [vmem:[#allocation8 + $0x20] sm:$0xf]
    %v1193 = vld [vmem:[#allocation8 + $0x24] sm:$0xf]
    %v1194 = vld [vmem:[#allocation8 + $0x28] sm:$0xf]
    %v1195 = vld [vmem:[#allocation8 + $0x2c] sm:$0xf]
    %v1196 = vld [vmem:[#allocation8 + $0x30] sm:$0xf]
    %v1197 = vld [vmem:[#allocation8 + $0x34] sm:$0xf]
    %v1198 = vld [vmem:[#allocation8 + $0x38] sm:$0xf]
    %v1199 = vld [vmem:[#allocation8 + $0x3c] sm:$0xf]
    %v1216 = vunpack.c.l.b16 %v1184
    %v1217 = vunpack.c.l.b16 %v1185
    %v1218 = vunpack.c.l.b16 %v1186
    %v1219 = vunpack.c.l.b16 %v1187
    %v1220 = vunpack.c.l.b16 %v1188
    %v1221 = vunpack.c.l.b16 %v1189
    %v1222 = vunpack.c.l.b16 %v1190
    %v1223 = vunpack.c.l.b16 %v1191
    %v1224 = vunpack.c.l.b16 %v1192
    %v1225 = vunpack.c.l.b16 %v1193
    %v1226 = vunpack.c.l.b16 %v1194
    %v1227 = vunpack.c.l.b16 %v1195
    %v1228 = vunpack.c.l.b16 %v1196
    %v1229 = vunpack.c.l.b16 %v1197
    %v1230 = vunpack.c.l.b16 %v1198
    %v1231 = vunpack.c.l.b16 %v1199
    %v1232 = vpack.c.b16 %v1217, %v1216
    %v1233 = vpack.c.b16 %v1219, %v1218
    %v1234 = vpack.c.b16 %v1221, %v1220
    %v1235 = vpack.c.b16 %v1223, %v1222
    %v1236 = vpack.c.b16 %v1225, %v1224
    %v1237 = vpack.c.b16 %v1227, %v1226
    %v1238 = vpack.c.b16 %v1229, %v1228
    %v1239 = vpack.c.b16 %v1231, %v1230
    %1248 = vmatprep.subr.bf16.mxu0 0
    %1249 = vmatpush1.bf16.msra.mxu0 %v1232
    %1250 = vmatprep.subr.bf16.mxu0 0
    %1251 = vmatpush1.bf16.msra.mxu0 %v1233
    %1252 = vmatprep.subr.bf16.mxu0 0
    %1253 = vmatpush1.bf16.msra.mxu0 %v1234
    %1254 = vmatprep.subr.bf16.mxu0 0
    %1255 = vmatpush1.bf16.msra.mxu0 %v1235
    %1256 = vmatprep.subr.bf16.mxu0 0
    %1257 = vmatpush1.bf16.msra.mxu0 %v1236
    %1258 = vmatprep.subr.bf16.mxu0 0
    %1259 = vmatpush1.bf16.msra.mxu0 %v1237
    %1260 = vmatprep.subr.bf16.mxu0 0
    %1261 = vmatpush1.bf16.msra.mxu0 %v1238
    %1262 = vmatprep.subr.bf16.mxu0 0
    %1263 = vmatpush1.bf16.msra.mxu0 %v1239
    %1264 = vmatprep.subr.bf16.mxu0 0
    %1265 = vmatpush1.bf16.msra.mxu0 0
    %1266 = vmatprep.subr.bf16.mxu0 0
    %1267 = vmatpush1.bf16.msra.mxu0 0
    %1268 = vmatprep.subr.bf16.mxu0 0
    %1269 = vmatpush1.bf16.msra.mxu0 0
    %1270 = vmatprep.subr.bf16.mxu0 0
    %1271 = vmatpush1.bf16.msra.mxu0 0
    %1272 = vmatprep.subr.bf16.mxu0 0
    %1273 = vmatpush1.bf16.msra.mxu0 0
    %1274 = vmatprep.subr.bf16.mxu0 0
    %1275 = vmatpush1.bf16.msra.mxu0 0
    %1276 = vmatprep.subr.bf16.mxu0 0
    %1277 = vmatpush1.bf16.msra.mxu0 0
    %1278 = vmatprep.subr.bf16.mxu0 0
    %1279 = vmatpush1.bf16.msra.mxu0 0
    %1280 = vmatprep.mubr.bf16.mxu0 0
    %1281 = vmatmul.mubr.bf16.gmra.mrb[0].mxu0 %v1168
    %v1282 = vpop.f32.mrb[0].mxu0
    %v1283 = vadd.f32 0.0, %v1282
    %v1284 = vpop.f32.mrb[0].mxu0
    %v1285 = vpop.f32.mrb[0].mxu0
    %v1286 = vadd.f32 0.0, %v1285
    %v1287 = vpop.f32.mrb[0].mxu0
    %1288 = vmatprep.mubr.bf16.mxu0 0
    %1289 = vmatmul.mubr.bf16.gmra.mrb[0].mxu0 %v1169
    %v1290 = vpop.f32.mrb[0].mxu0
    %v1291 = vadd.f32 0.0, %v1290
    %v1292 = vpop.f32.mrb[0].mxu0
    %v1293 = vpop.f32.mrb[0].mxu0
    %v1294 = vadd.f32 0.0, %v1293
    %v1295 = vpop.f32.mrb[0].mxu0
    %1296 = vmatprep.mubr.bf16.mxu0 0
    %1297 = vmatmul.mubr.bf16.gmra.mrb[0].mxu0 %v1170
    %v1298 = vpop.f32.mrb[0].mxu0
    %v1299 = vadd.f32 0.0, %v1298
    %v1300 = vpop.f32.mrb[0].mxu0
    %v1301 = vpop.f32.mrb[0].mxu0
    %v1302 = vadd.f32 0.0, %v1301
    %v1303 = vpop.f32.mrb[0].mxu0
    %1304 = vmatprep.mubr.bf16.mxu0 0
    %1305 = vmatmul.mubr.bf16.gmra.mrb[0].mxu0 %v1171
    %v1306 = vpop.f32.mrb[0].mxu0
    %v1307 = vadd.f32 0.0, %v1306
    %v1308 = vpop.f32.mrb[0].mxu0
    %v1309 = vpop.f32.mrb[0].mxu0
    %v1310 = vadd.f32 0.0, %v1309
    %v1311 = vpop.f32.mrb[0].mxu0
    %1312 = vmatprep.mubr.bf16.mxu0 0
    %1313 = vmatmul.mubr.bf16.gmra.mrb[0].mxu0 %v1172
    %v1314 = vpop.f32.mrb[0].mxu0
    %v1315 = vadd.f32 0.0, %v1314
    %v1316 = vpop.f32.mrb[0].mxu0
    %v1317 = vpop.f32.mrb[0].mxu0
    %v1318 = vadd.f32 0.0, %v1317
    %v1319 = vpop.f32.mrb[0].mxu0
    %1320 = vmatprep.mubr.bf16.mxu0 0
    %1321 = vmatmul.mubr.bf16.gmra.mrb[0].mxu0 %v1173
    %v1322 = vpop.f32.mrb[0].mxu0
    %v1323 = vadd.f32 0.0, %v1322
    %v1324 = vpop.f32.mrb[0].mxu0
    %v1325 = vpop.f32.mrb[0].mxu0
    %v1326 = vadd.f32 0.0, %v1325
    %v1327 = vpop.f32.mrb[0].mxu0
    %1328 = vmatprep.mubr.bf16.mxu0 0
    %1329 = vmatmul.mubr.bf16.gmra.mrb[0].mxu0 %v1174
    %v1330 = vpop.f32.mrb[0].mxu0
    %v1331 = vadd.f32 0.0, %v1330
    %v1332 = vpop.f32.mrb[0].mxu0
    %v1333 = vpop.f32.mrb[0].mxu0
    %v1334 = vadd.f32 0.0, %v1333
    %v1335 = vpop.f32.mrb[0].mxu0
    %1336 = vmatprep.mubr.bf16.mxu0 0
    %1337 = vmatmul.mubr.bf16.gmra.mrb[0].mxu0 %v1175
    %v1338 = vpop.f32.mrb[0].mxu0
    %v1339 = vadd.f32 0.0, %v1338
    %v1340 = vpop.f32.mrb[0].mxu0
    %v1341 = vpop.f32.mrb[0].mxu0
    %v1342 = vadd.f32 0.0, %v1341
    %v1343 = vpop.f32.mrb[0].mxu0
    %1344 = vmatprep.mubr.bf16.mxu0 0
    %1345 = vmatmul.mubr.bf16.gmra.mrb[0].mxu0 %v1176
    %v1346 = vpop.f32.mrb[0].mxu0
    %v1347 = vadd.f32 0.0, %v1346
    %v1348 = vpop.f32.mrb[0].mxu0
    %v1349 = vpop.f32.mrb[0].mxu0
    %v1350 = vadd.f32 0.0, %v1349
    %v1351 = vpop.f32.mrb[0].mxu0
    %1352 = vmatprep.mubr.bf16.mxu0 0
    %1353 = vmatmul.mubr.bf16.gmra.mrb[0].mxu0 %v1177
    %v1354 = vpop.f32.mrb[0].mxu0
    %v1355 = vadd.f32 0.0, %v1354
    %v1356 = vpop.f32.mrb[0].mxu0
    %v1357 = vpop.f32.mrb[0].mxu0
    %v1358 = vadd.f32 0.0, %v1357
    %v1359 = vpop.f32.mrb[0].mxu0
    %1360 = vmatprep.mubr.bf16.mxu0 0
    %1361 = vmatmul.mubr.bf16.gmra.mrb[0].mxu0 %v1178
    %v1362 = vpop.f32.mrb[0].mxu0
    %v1363 = vadd.f32 0.0, %v1362
    %v1364 = vpop.f32.mrb[0].mxu0
    %v1365 = vpop.f32.mrb[0].mxu0
    %v1366 = vadd.f32 0.0, %v1365
    %v1367 = vpop.f32.mrb[0].mxu0
    %1368 = vmatprep.mubr.bf16.mxu0 0
    %1369 = vmatmul.mubr.bf16.gmra.mrb[0].mxu0 %v1179
    %v1370 = vpop.f32.mrb[0].mxu0
    %v1371 = vadd.f32 0.0, %v1370
    %v1372 = vpop.f32.mrb[0].mxu0
    %v1373 = vpop.f32.mrb[0].mxu0
    %v1374 = vadd.f32 0.0, %v1373
    %v1375 = vpop.f32.mrb[0].mxu0
    %1376 = vmatprep.mubr.bf16.mxu0 0
    %1377 = vmatmul.mubr.bf16.gmra.mrb[0].mxu0 %v1180
    %v1378 = vpop.f32.mrb[0].mxu0
    %v1379 = vadd.f32 0.0, %v1378
    %v1380 = vpop.f32.mrb[0].mxu0
    %v1381 = vpop.f32.mrb[0].mxu0
    %v1382 = vadd.f32 0.0, %v1381
    %v1383 = vpop.f32.mrb[0].mxu0
    %1384 = vmatprep.mubr.bf16.mxu0 0
    %1385 = vmatmul.mubr.bf16.gmra.mrb[0].mxu0 %v1181
    %v1386 = vpop.f32.mrb[0].mxu0
    %v1387 = vadd.f32 0.0, %v1386
    %v1388 = vpop.f32.mrb[0].mxu0
    %v1389 = vpop.f32.mrb[0].mxu0
    %v1390 = vadd.f32 0.0, %v1389
    %v1391 = vpop.f32.mrb[0].mxu0
    %1392 = vmatprep.mubr.bf16.mxu0 0
    %1393 = vmatmul.mubr.bf16.gmra.mrb[0].mxu0 %v1182
    %v1394 = vpop.f32.mrb[0].mxu0
    %v1395 = vadd.f32 0.0, %v1394
    %v1396 = vpop.f32.mrb[0].mxu0
    %v1397 = vpop.f32.mrb[0].mxu0
    %v1398 = vadd.f32 0.0, %v1397
    %v1399 = vpop.f32.mrb[0].mxu0
    %1400 = vmatprep.mubr.bf16.mxu0 0
    %1401 = vmatmul.mubr.bf16.gmra.mrb[0].mxu0 %v1183
    %v1402 = vpop.f32.mrb[0].mxu0
    %v1403 = vadd.f32 0.0, %v1402
    %v1404 = vpop.f32.mrb[0].mxu0
    %v1405 = vpop.f32.mrb[0].mxu0
    %v1406 = vadd.f32 0.0, %v1405
    %v1407 = vpop.f32.mrb[0].mxu0
    %1408 = vdwg.mxu0
    %v1409 = vadd.f32 %v1283, %v1286
    %v1410 = vadd.f32 %v1409, %v1291
    %v1411 = vadd.f32 %v1410, %v1294
    %v1412 = vadd.f32 %v1411, %v1299
    %v1413 = vadd.f32 %v1412, %v1302
    %v1414 = vadd.f32 %v1413, %v1307
    %v1415 = vadd.f32 %v1414, %v1310
    %v1416 = vadd.f32 %v1415, %v1315
    %v1417 = vadd.f32 %v1416, %v1318
    %v1418 = vadd.f32 %v1417, %v1323
    %v1419 = vadd.f32 %v1418, %v1326
    %v1420 = vadd.f32 %v1419, %v1331
    %v1421 = vadd.f32 %v1420, %v1334
    %v1422 = vadd.f32 %v1421, %v1339
    %v1423 = vadd.f32 %v1422, %v1342
    %v1424 = vadd.f32 %v1423, %v1347
    %v1425 = vadd.f32 %v1424, %v1350
    %v1426 = vadd.f32 %v1425, %v1355
    %v1427 = vadd.f32 %v1426, %v1358
    %v1428 = vadd.f32 %v1427, %v1363
    %v1429 = vadd.f32 %v1428, %v1366
    %v1430 = vadd.f32 %v1429, %v1371
    %v1431 = vadd.f32 %v1430, %v1374
    %v1432 = vadd.f32 %v1431, %v1379
    %v1433 = vadd.f32 %v1432, %v1382
    %v1434 = vadd.f32 %v1433, %v1387
    %v1435 = vadd.f32 %v1434, %v1390
    %v1436 = vadd.f32 %v1435, %v1395
    %v1437 = vadd.f32 %v1436, %v1398
    %v1438 = vadd.f32 %v1437, %v1403
    %v1439 = vadd.f32 %v1438, %v1406
    %v1440 = vrot.slane %v1439, 4
    %v1441 = vadd.f32 %v1439, %v1440
    %v1442 = vrot.slane %v1441, 2
    %v1443 = vadd.f32 %v1441, %v1442
    %v1444 = vrot.slane %v1443, 1
    %v1445 = vadd.f32 %v1443, %v1444
    %v1446 = vmul.f32 %v1445, %v500
    %v1447 = vmul.f32 %v1283, %v1283
    %v1448 = vmul.f32 %v1286, %v1286
    %v1449 = vmul.f32 %v1291, %v1291
    %v1450 = vmul.f32 %v1294, %v1294
    %v1451 = vmul.f32 %v1299, %v1299
    %v1452 = vmul.f32 %v1302, %v1302
    %v1453 = vmul.f32 %v1307, %v1307
    %v1454 = vmul.f32 %v1310, %v1310
    %v1455 = vmul.f32 %v1315, %v1315
    %v1456 = vmul.f32 %v1318, %v1318
    %v1457 = vmul.f32 %v1323, %v1323
    %v1458 = vmul.f32 %v1326, %v1326
    %v1459 = vmul.f32 %v1331, %v1331
    %v1460 = vmul.f32 %v1334, %v1334
    %v1461 = vmul.f32 %v1339, %v1339
    %v1462 = vmul.f32 %v1342, %v1342
    %v1463 = vmul.f32 %v1347, %v1347
    %v1464 = vmul.f32 %v1350, %v1350
    %v1465 = vmul.f32 %v1355, %v1355
    %v1466 = vmul.f32 %v1358, %v1358
    %v1467 = vmul.f32 %v1363, %v1363
    %v1468 = vmul.f32 %v1366, %v1366
    %v1469 = vmul.f32 %v1371, %v1371
    %v1470 = vmul.f32 %v1374, %v1374
    %v1471 = vmul.f32 %v1379, %v1379
    %v1472 = vmul.f32 %v1382, %v1382
    %v1473 = vmul.f32 %v1387, %v1387
    %v1474 = vmul.f32 %v1390, %v1390
    %v1475 = vmul.f32 %v1395, %v1395
    %v1476 = vmul.f32 %v1398, %v1398
    %v1477 = vmul.f32 %v1403, %v1403
    %v1478 = vmul.f32 %v1406, %v1406
    %v1479 = vadd.f32 %v1447, %v1448
    %v1480 = vadd.f32 %v1479, %v1449
    %v1481 = vadd.f32 %v1480, %v1450
    %v1482 = vadd.f32 %v1481, %v1451
    %v1483 = vadd.f32 %v1482, %v1452
    %v1484 = vadd.f32 %v1483, %v1453
    %v1485 = vadd.f32 %v1484, %v1454
    %v1486 = vadd.f32 %v1485, %v1455
    %v1487 = vadd.f32 %v1486, %v1456
    %v1488 = vadd.f32 %v1487, %v1457
    %v1489 = vadd.f32 %v1488, %v1458
    %v1490 = vadd.f32 %v1489, %v1459
    %v1491 = vadd.f32 %v1490, %v1460
    %v1492 = vadd.f32 %v1491, %v1461
    %v1493 = vadd.f32 %v1492, %v1462
    %v1494 = vadd.f32 %v1493, %v1463
    %v1495 = vadd.f32 %v1494, %v1464
    %v1496 = vadd.f32 %v1495, %v1465
    %v1497 = vadd.f32 %v1496, %v1466
    %v1498 = vadd.f32 %v1497, %v1467
    %v1499 = vadd.f32 %v1498, %v1468
    %v1500 = vadd.f32 %v1499, %v1469
    %v1501 = vadd.f32 %v1500, %v1470
    %v1502 = vadd.f32 %v1501, %v1471
    %v1503 = vadd.f32 %v1502, %v1472
    %v1504 = vadd.f32 %v1503, %v1473
    %v1505 = vadd.f32 %v1504, %v1474
    %v1506 = vadd.f32 %v1505, %v1475
    %v1507 = vadd.f32 %v1506, %v1476
    %v1508 = vadd.f32 %v1507, %v1477
    %v1509 = vadd.f32 %v1508, %v1478
    %v1510 = vrot.slane %v1509, 4
    %v1511 = vadd.f32 %v1509, %v1510
    %v1512 = vrot.slane %v1511, 2
    %v1513 = vadd.f32 %v1511, %v1512
    %v1514 = vrot.slane %v1513, 1
    %v1515 = vadd.f32 %v1513, %v1514
    %v1516 = vmul.f32 %v1515, %v500
    %v1517 = vmul.f32 %v1446, %v1446
    %v1518 = vsub.f32 %v1516, %v1517
    %v1519 = vmax.f32 %v1518, 0.0
    %v1520 = vadd.f32 %v1519, 1e-05
    %v1521 = vrsqrt.pop %v1520
    %v1522 = vrot.slane %v77, 4
    %v1524 = vmul.f32 %v1522, %v1521
    %v1525 = vmul.f32 %v1446, %v1524
    %v1528 = vunpack.c.l.s4 1983009808
    %v1529 = vunpack.c.0.s8 %v1528
    %v1530 = vlaneseq
    %v1531 = vshrl.u32 %v1530, 7
    %v1532 = vsub.s32 %v1529, %v1531
    %v1533 = vrot.slane %v1525, %v1532
    %v1534 = vrot.slane %v1533, 7
    %v1536 = vsub.f32 %v1522, %v1534
    %v1537 = vlaneseq
    %v1538 = vshrl.u32 %v1537, 7
    %v1539 = vsub.s32 0, %v1538
    %v1540 = vrot.slane %v1524, %v1539
    %v1541 = vmul.f32 %v1283, %v1540
    %v1542 = vmul.f32 %v1286, %v1540
    %v1543 = vmul.f32 %v1291, %v1540
    %v1544 = vmul.f32 %v1294, %v1540
    %v1545 = vmul.f32 %v1299, %v1540
    %v1546 = vmul.f32 %v1302, %v1540
    %v1547 = vmul.f32 %v1307, %v1540
    %v1548 = vmul.f32 %v1310, %v1540
    %v1549 = vmul.f32 %v1315, %v1540
    %v1550 = vmul.f32 %v1318, %v1540
    %v1551 = vmul.f32 %v1323, %v1540
    %v1552 = vmul.f32 %v1326, %v1540
    %v1553 = vmul.f32 %v1331, %v1540
    %v1554 = vmul.f32 %v1334, %v1540
    %v1555 = vmul.f32 %v1339, %v1540
    %v1556 = vmul.f32 %v1342, %v1540
    %v1557 = vmul.f32 %v1347, %v1540
    %v1558 = vmul.f32 %v1350, %v1540
    %v1559 = vmul.f32 %v1355, %v1540
    %v1560 = vmul.f32 %v1358, %v1540
    %v1561 = vmul.f32 %v1363, %v1540
    %v1562 = vmul.f32 %v1366, %v1540
    %v1563 = vmul.f32 %v1371, %v1540
    %v1564 = vmul.f32 %v1374, %v1540
    %v1565 = vmul.f32 %v1379, %v1540
    %v1566 = vmul.f32 %v1382, %v1540
    %v1567 = vmul.f32 %v1387, %v1540
    %v1568 = vmul.f32 %v1390, %v1540
    %v1569 = vmul.f32 %v1395, %v1540
    %v1570 = vmul.f32 %v1398, %v1540
    %v1571 = vmul.f32 %v1403, %v1540
    %v1572 = vmul.f32 %v1406, %v1540
    %v1573 = vlaneseq
    %v1574 = vshrl.u32 %v1573, 7
    %v1575 = vsub.s32 1, %v1574
    %v1576 = vrot.slane %v1536, %v1575
    %v1577 = vadd.f32 %v1541, %v1576
    %v1578 = vadd.f32 %v1542, %v1576
    %v1579 = vadd.f32 %v1543, %v1576
    %v1580 = vadd.f32 %v1544, %v1576
    %v1581 = vadd.f32 %v1545, %v1576
    %v1582 = vadd.f32 %v1546, %v1576
    %v1583 = vadd.f32 %v1547, %v1576
    %v1584 = vadd.f32 %v1548, %v1576
    %v1585 = vadd.f32 %v1549, %v1576
    %v1586 = vadd.f32 %v1550, %v1576
    %v1587 = vadd.f32 %v1551, %v1576
    %v1588 = vadd.f32 %v1552, %v1576
    %v1589 = vadd.f32 %v1553, %v1576
    %v1590 = vadd.f32 %v1554, %v1576
    %v1591 = vadd.f32 %v1555, %v1576
    %v1592 = vadd.f32 %v1556, %v1576
    %v1593 = vadd.f32 %v1557, %v1576
    %v1594 = vadd.f32 %v1558, %v1576
    %v1595 = vadd.f32 %v1559, %v1576
    %v1596 = vadd.f32 %v1560, %v1576
    %v1597 = vadd.f32 %v1561, %v1576
    %v1598 = vadd.f32 %v1562, %v1576
    %v1599 = vadd.f32 %v1563, %v1576
    %v1600 = vadd.f32 %v1564, %v1576
    %v1601 = vadd.f32 %v1565, %v1576
    %v1602 = vadd.f32 %v1566, %v1576
    %v1603 = vadd.f32 %v1567, %v1576
    %v1604 = vadd.f32 %v1568, %v1576
    %v1605 = vadd.f32 %v1569, %v1576
    %v1606 = vadd.f32 %v1570, %v1576
    %v1607 = vadd.f32 %v1571, %v1576
    %v1608 = vadd.f32 %v1572, %v1576
    %v1609 = vmax.f32 %v1577, 0.0
    %v1610 = vmax.f32 %v1578, 0.0
    %v1611 = vmax.f32 %v1579, 0.0
    %v1612 = vmax.f32 %v1580, 0.0
    %v1613 = vmax.f32 %v1581, 0.0
    %v1614 = vmax.f32 %v1582, 0.0
    %v1615 = vmax.f32 %v1583, 0.0
    %v1616 = vmax.f32 %v1584, 0.0
    %v1617 = vmax.f32 %v1585, 0.0
    %v1618 = vmax.f32 %v1586, 0.0
    %v1619 = vmax.f32 %v1587, 0.0
    %v1620 = vmax.f32 %v1588, 0.0
    %v1621 = vmax.f32 %v1589, 0.0
    %v1622 = vmax.f32 %v1590, 0.0
    %v1623 = vmax.f32 %v1591, 0.0
    %v1624 = vmax.f32 %v1592, 0.0
    %v1625 = vmax.f32 %v1593, 0.0
    %v1626 = vmax.f32 %v1594, 0.0
    %v1627 = vmax.f32 %v1595, 0.0
    %v1628 = vmax.f32 %v1596, 0.0
    %v1629 = vmax.f32 %v1597, 0.0
    %v1630 = vmax.f32 %v1598, 0.0
    %v1631 = vmax.f32 %v1599, 0.0
    %v1632 = vmax.f32 %v1600, 0.0
    %v1633 = vmax.f32 %v1601, 0.0
    %v1634 = vmax.f32 %v1602, 0.0
    %v1635 = vmax.f32 %v1603, 0.0
    %v1636 = vmax.f32 %v1604, 0.0
    %v1637 = vmax.f32 %v1605, 0.0
    %v1638 = vmax.f32 %v1606, 0.0
    %v1639 = vmax.f32 %v1607, 0.0
    %v1640 = vmax.f32 %v1608, 0.0
    %v1641 = vlaneseq
    %v1642 = vand.u32 %v1641, 127
    %vm1643 = vcmp.lt.s32.totalorder %v1642, 10
    %v1644 = vsel %vm1643, 1, 0
    %vm1645 = vcmp.eq.s32.totalorder %v1644, 1
    %v1646 = vsel %vm1645, %v1609, -inf
    %v1647 = vsel %vm1645, %v1610, -inf
    %v1648 = vsel %vm1645, %v1611, -inf
    %v1649 = vsel %vm1645, %v1612, -inf
    %v1650 = vsel %vm1645, %v1613, -inf
    %v1651 = vsel %vm1645, %v1614, -inf
    %v1652 = vsel %vm1645, %v1615, -inf
    %v1653 = vsel %vm1645, %v1616, -inf
    %v1654 = vsel %vm1645, %v1617, -inf
    %v1655 = vsel %vm1645, %v1618, -inf
    %v1656 = vsel %vm1645, %v1619, -inf
    %v1657 = vsel %vm1645, %v1620, -inf
    %v1658 = vsel %vm1645, %v1621, -inf
    %v1659 = vsel %vm1645, %v1622, -inf
    %v1660 = vsel %vm1645, %v1623, -inf
    %v1661 = vsel %vm1645, %v1624, -inf
    %v1662 = vsel %vm1645, %v1625, -inf
    %v1663 = vsel %vm1645, %v1626, -inf
    %v1664 = vsel %vm1645, %v1627, -inf
    %v1665 = vsel %vm1645, %v1628, -inf
    %v1666 = vsel %vm1645, %v1629, -inf
    %v1667 = vsel %vm1645, %v1630, -inf
    %v1668 = vsel %vm1645, %v1631, -inf
    %v1669 = vsel %vm1645, %v1632, -inf
    %v1670 = vsel %vm1645, %v1633, -inf
    %v1671 = vsel %vm1645, %v1634, -inf
    %v1672 = vsel %vm1645, %v1635, -inf
    %v1673 = vsel %vm1645, %v1636, -inf
    %v1674 = vsel %vm1645, %v1637, -inf
    %v1675 = vsel %vm1645, %v1638, -inf
    %v1676 = vsel %vm1645, %v1639, -inf
    %v1677 = vsel %vm1645, %v1640, -inf
    %1678 = vmax.xlane.f32.xlu0 %v1646
    %v1679 = vpop.xlane.xlu0 %1678
    %1680 = vmax.xlane.f32.xlu0 %v1647
    %v1681 = vpop.xlane.xlu0 %1680
    %1682 = vmax.xlane.f32.xlu0 %v1648
    %v1683 = vpop.xlane.xlu0 %1682
    %1684 = vmax.xlane.f32.xlu0 %v1649
    %v1685 = vpop.xlane.xlu0 %1684
    %1686 = vmax.xlane.f32.xlu0 %v1650
    %v1687 = vpop.xlane.xlu0 %1686
    %1688 = vmax.xlane.f32.xlu0 %v1651
    %v1689 = vpop.xlane.xlu0 %1688
    %1690 = vmax.xlane.f32.xlu0 %v1652
    %v1691 = vpop.xlane.xlu0 %1690
    %1692 = vmax.xlane.f32.xlu0 %v1653
    %v1693 = vpop.xlane.xlu0 %1692
    %1694 = vmax.xlane.f32.xlu0 %v1654
    %v1695 = vpop.xlane.xlu0 %1694
    %1696 = vmax.xlane.f32.xlu0 %v1655
    %v1697 = vpop.xlane.xlu0 %1696
    %1698 = vmax.xlane.f32.xlu0 %v1656
    %v1699 = vpop.xlane.xlu0 %1698
    %1700 = vmax.xlane.f32.xlu0 %v1657
    %v1701 = vpop.xlane.xlu0 %1700
    %1702 = vmax.xlane.f32.xlu0 %v1658
    %v1703 = vpop.xlane.xlu0 %1702
    %1704 = vmax.xlane.f32.xlu0 %v1659
    %v1705 = vpop.xlane.xlu0 %1704
    %1706 = vmax.xlane.f32.xlu0 %v1660
    %v1707 = vpop.xlane.xlu0 %1706
    %1708 = vmax.xlane.f32.xlu0 %v1661
    %v1709 = vpop.xlane.xlu0 %1708
    %1710 = vmax.xlane.f32.xlu0 %v1662
    %v1711 = vpop.xlane.xlu0 %1710
    %1712 = vmax.xlane.f32.xlu0 %v1663
    %v1713 = vpop.xlane.xlu0 %1712
    %1714 = vmax.xlane.f32.xlu0 %v1664
    %v1715 = vpop.xlane.xlu0 %1714
    %1716 = vmax.xlane.f32.xlu0 %v1665
    %v1717 = vpop.xlane.xlu0 %1716
    %1718 = vmax.xlane.f32.xlu0 %v1666
    %v1719 = vpop.xlane.xlu0 %1718
    %1720 = vmax.xlane.f32.xlu0 %v1667
    %v1721 = vpop.xlane.xlu0 %1720
    %1722 = vmax.xlane.f32.xlu0 %v1668
    %v1723 = vpop.xlane.xlu0 %1722
    %1724 = vmax.xlane.f32.xlu0 %v1669
    %v1725 = vpop.xlane.xlu0 %1724
    %1726 = vmax.xlane.f32.xlu0 %v1670
    %v1727 = vpop.xlane.xlu0 %1726
    %1728 = vmax.xlane.f32.xlu0 %v1671
    %v1729 = vpop.xlane.xlu0 %1728
    %1730 = vmax.xlane.f32.xlu0 %v1672
    %v1731 = vpop.xlane.xlu0 %1730
    %1732 = vmax.xlane.f32.xlu0 %v1673
    %v1733 = vpop.xlane.xlu0 %1732
    %1734 = vmax.xlane.f32.xlu0 %v1674
    %v1735 = vpop.xlane.xlu0 %1734
    %1736 = vmax.xlane.f32.xlu0 %v1675
    %v1737 = vpop.xlane.xlu0 %1736
    %1738 = vmax.xlane.f32.xlu0 %v1676
    %v1739 = vpop.xlane.xlu0 %1738
    %1740 = vmax.xlane.f32.xlu0 %v1677
    %v1741 = vpop.xlane.xlu0 %1740
    %v1742 = vsub.f32 %v1609, %v1679
    %v1743 = vsub.f32 %v1610, %v1681
    %v1744 = vsub.f32 %v1611, %v1683
    %v1745 = vsub.f32 %v1612, %v1685
    %v1746 = vsub.f32 %v1613, %v1687
    %v1747 = vsub.f32 %v1614, %v1689
    %v1748 = vsub.f32 %v1615, %v1691
    %v1749 = vsub.f32 %v1616, %v1693
    %v1750 = vsub.f32 %v1617, %v1695
    %v1751 = vsub.f32 %v1618, %v1697
    %v1752 = vsub.f32 %v1619, %v1699
    %v1753 = vsub.f32 %v1620, %v1701
    %v1754 = vsub.f32 %v1621, %v1703
    %v1755 = vsub.f32 %v1622, %v1705
    %v1756 = vsub.f32 %v1623, %v1707
    %v1757 = vsub.f32 %v1624, %v1709
    %v1758 = vsub.f32 %v1625, %v1711
    %v1759 = vsub.f32 %v1626, %v1713
    %v1760 = vsub.f32 %v1627, %v1715
    %v1761 = vsub.f32 %v1628, %v1717
    %v1762 = vsub.f32 %v1629, %v1719
    %v1763 = vsub.f32 %v1630, %v1721
    %v1764 = vsub.f32 %v1631, %v1723
    %v1765 = vsub.f32 %v1632, %v1725
    %v1766 = vsub.f32 %v1633, %v1727
    %v1767 = vsub.f32 %v1634, %v1729
    %v1768 = vsub.f32 %v1635, %v1731
    %v1769 = vsub.f32 %v1636, %v1733
    %v1770 = vsub.f32 %v1637, %v1735
    %v1771 = vsub.f32 %v1638, %v1737
    %v1772 = vsub.f32 %v1639, %v1739
    %v1773 = vsub.f32 %v1640, %v1741
    %v1774 = vmul.f32 %v1742, 1.442695
    %v1775 = vpow.pop %v1774
    %v1776 = vmul.f32 %v1743, 1.442695
    %v1777 = vpow.pop %v1776
    %v1778 = vmul.f32 %v1744, 1.442695
    %v1779 = vpow.pop %v1778
    %v1780 = vmul.f32 %v1745, 1.442695
    %v1781 = vpow.pop %v1780
    %v1782 = vmul.f32 %v1746, 1.442695
    %v1783 = vpow.pop %v1782
    %v1784 = vmul.f32 %v1747, 1.442695
    %v1785 = vpow.pop %v1784
    %v1786 = vmul.f32 %v1748, 1.442695
    %v1787 = vpow.pop %v1786
    %v1788 = vmul.f32 %v1749, 1.442695
    %v1789 = vpow.pop %v1788
    %v1790 = vmul.f32 %v1750, 1.442695
    %v1791 = vpow.pop %v1790
    %v1792 = vmul.f32 %v1751, 1.442695
    %v1793 = vpow.pop %v1792
    %v1794 = vmul.f32 %v1752, 1.442695
    %v1795 = vpow.pop %v1794
    %v1796 = vmul.f32 %v1753, 1.442695
    %v1797 = vpow.pop %v1796
    %v1798 = vmul.f32 %v1754, 1.442695
    %v1799 = vpow.pop %v1798
    %v1800 = vmul.f32 %v1755, 1.442695
    %v1801 = vpow.pop %v1800
    %v1802 = vmul.f32 %v1756, 1.442695
    %v1803 = vpow.pop %v1802
    %v1804 = vmul.f32 %v1757, 1.442695
    %v1805 = vpow.pop %v1804
    %v1806 = vmul.f32 %v1758, 1.442695
    %v1807 = vpow.pop %v1806
    %v1808 = vmul.f32 %v1759, 1.442695
    %v1809 = vpow.pop %v1808
    %v1810 = vmul.f32 %v1760, 1.442695
    %v1811 = vpow.pop %v1810
    %v1812 = vmul.f32 %v1761, 1.442695
    %v1813 = vpow.pop %v1812
    %v1814 = vmul.f32 %v1762, 1.442695
    %v1815 = vpow.pop %v1814
    %v1816 = vmul.f32 %v1763, 1.442695
    %v1817 = vpow.pop %v1816
    %v1818 = vmul.f32 %v1764, 1.442695
    %v1819 = vpow.pop %v1818
    %v1820 = vmul.f32 %v1765, 1.442695
    %v1821 = vpow.pop %v1820
    %v1822 = vmul.f32 %v1766, 1.442695
    %v1823 = vpow.pop %v1822
    %v1824 = vmul.f32 %v1767, 1.442695
    %v1825 = vpow.pop %v1824
    %v1826 = vmul.f32 %v1768, 1.442695
    %v1827 = vpow.pop %v1826
    %v1828 = vmul.f32 %v1769, 1.442695
    %v1829 = vpow.pop %v1828
    %v1830 = vmul.f32 %v1770, 1.442695
    %v1831 = vpow.pop %v1830
    %v1832 = vmul.f32 %v1771, 1.442695
    %v1833 = vpow.pop %v1832
    %v1834 = vmul.f32 %v1772, 1.442695
    %v1835 = vpow.pop %v1834
    %v1836 = vmul.f32 %v1773, 1.442695
    %v1837 = vpow.pop %v1836
    %v1838 = vsel %vm1645, %v1775, 0.0
    %v1839 = vsel %vm1645, %v1777, 0.0
    %v1840 = vsel %vm1645, %v1779, 0.0
    %v1841 = vsel %vm1645, %v1781, 0.0
    %v1842 = vsel %vm1645, %v1783, 0.0
    %v1843 = vsel %vm1645, %v1785, 0.0
    %v1844 = vsel %vm1645, %v1787, 0.0
    %v1845 = vsel %vm1645, %v1789, 0.0
    %v1846 = vsel %vm1645, %v1791, 0.0
    %v1847 = vsel %vm1645, %v1793, 0.0
    %v1848 = vsel %vm1645, %v1795, 0.0
    %v1849 = vsel %vm1645, %v1797, 0.0
    %v1850 = vsel %vm1645, %v1799, 0.0
    %v1851 = vsel %vm1645, %v1801, 0.0
    %v1852 = vsel %vm1645, %v1803, 0.0
    %v1853 = vsel %vm1645, %v1805, 0.0
    %v1854 = vsel %vm1645, %v1807, 0.0
    %v1855 = vsel %vm1645, %v1809, 0.0
    %v1856 = vsel %vm1645, %v1811, 0.0
    %v1857 = vsel %vm1645, %v1813, 0.0
    %v1858 = vsel %vm1645, %v1815, 0.0
    %v1859 = vsel %vm1645, %v1817, 0.0
    %v1860 = vsel %vm1645, %v1819, 0.0
    %v1861 = vsel %vm1645, %v1821, 0.0
    %v1862 = vsel %vm1645, %v1823, 0.0
    %v1863 = vsel %vm1645, %v1825, 0.0
    %v1864 = vsel %vm1645, %v1827, 0.0
    %v1865 = vsel %vm1645, %v1829, 0.0
    %v1866 = vsel %vm1645, %v1831, 0.0
    %v1867 = vsel %vm1645, %v1833, 0.0
    %v1868 = vsel %vm1645, %v1835, 0.0
    %v1869 = vsel %vm1645, %v1837, 0.0
    %1870 = vadd.xlane.f32.xlu0 %v1838
    %v1871 = vpop.xlane.xlu0 %1870
    %1872 = vadd.xlane.f32.xlu0 %v1839
    %v1873 = vpop.xlane.xlu0 %1872
    %1874 = vadd.xlane.f32.xlu0 %v1840
    %v1875 = vpop.xlane.xlu0 %1874
    %1876 = vadd.xlane.f32.xlu0 %v1841
    %v1877 = vpop.xlane.xlu0 %1876
    %1878 = vadd.xlane.f32.xlu0 %v1842
    %v1879 = vpop.xlane.xlu0 %1878
    %1880 = vadd.xlane.f32.xlu0 %v1843
    %v1881 = vpop.xlane.xlu0 %1880
    %1882 = vadd.xlane.f32.xlu0 %v1844
    %v1883 = vpop.xlane.xlu0 %1882
    %1884 = vadd.xlane.f32.xlu0 %v1845
    %v1885 = vpop.xlane.xlu0 %1884
    %1886 = vadd.xlane.f32.xlu0 %v1846
    %v1887 = vpop.xlane.xlu0 %1886
    %1888 = vadd.xlane.f32.xlu0 %v1847
    %v1889 = vpop.xlane.xlu0 %1888
    %1890 = vadd.xlane.f32.xlu0 %v1848
    %v1891 = vpop.xlane.xlu0 %1890
    %1892 = vadd.xlane.f32.xlu0 %v1849
    %v1893 = vpop.xlane.xlu0 %1892
    %1894 = vadd.xlane.f32.xlu0 %v1850
    %v1895 = vpop.xlane.xlu0 %1894
    %1896 = vadd.xlane.f32.xlu0 %v1851
    %v1897 = vpop.xlane.xlu0 %1896
    %1898 = vadd.xlane.f32.xlu0 %v1852
    %v1899 = vpop.xlane.xlu0 %1898
    %1900 = vadd.xlane.f32.xlu0 %v1853
    %v1901 = vpop.xlane.xlu0 %1900
    %1902 = vadd.xlane.f32.xlu0 %v1854
    %v1903 = vpop.xlane.xlu0 %1902
    %1904 = vadd.xlane.f32.xlu0 %v1855
    %v1905 = vpop.xlane.xlu0 %1904
    %1906 = vadd.xlane.f32.xlu0 %v1856
    %v1907 = vpop.xlane.xlu0 %1906
    %1908 = vadd.xlane.f32.xlu0 %v1857
    %v1909 = vpop.xlane.xlu0 %1908
    %1910 = vadd.xlane.f32.xlu0 %v1858
    %v1911 = vpop.xlane.xlu0 %1910
    %1912 = vadd.xlane.f32.xlu0 %v1859
    %v1913 = vpop.xlane.xlu0 %1912
    %1914 = vadd.xlane.f32.xlu0 %v1860
    %v1915 = vpop.xlane.xlu0 %1914
    %1916 = vadd.xlane.f32.xlu0 %v1861
    %v1917 = vpop.xlane.xlu0 %1916
    %1918 = vadd.xlane.f32.xlu0 %v1862
    %v1919 = vpop.xlane.xlu0 %1918
    %1920 = vadd.xlane.f32.xlu0 %v1863
    %v1921 = vpop.xlane.xlu0 %1920
    %1922 = vadd.xlane.f32.xlu0 %v1864
    %v1923 = vpop.xlane.xlu0 %1922
    %1924 = vadd.xlane.f32.xlu0 %v1865
    %v1925 = vpop.xlane.xlu0 %1924
    %1926 = vadd.xlane.f32.xlu0 %v1866
    %v1927 = vpop.xlane.xlu0 %1926
    %1928 = vadd.xlane.f32.xlu0 %v1867
    %v1929 = vpop.xlane.xlu0 %1928
    %1930 = vadd.xlane.f32.xlu0 %v1868
    %v1931 = vpop.xlane.xlu0 %1930
    %1932 = vadd.xlane.f32.xlu0 %v1869
    %v1933 = vpop.xlane.xlu0 %1932
    %v1934 = vlog2.pop %v1871
    %v1935 = vmul.f32 %v1934, 0.6931472
    %v1936 = vlog2.pop %v1873
    %v1937 = vmul.f32 %v1936, 0.6931472
    %v1938 = vlog2.pop %v1875
    %v1939 = vmul.f32 %v1938, 0.6931472
    %v1940 = vlog2.pop %v1877
    %v1941 = vmul.f32 %v1940, 0.6931472
    %v1942 = vlog2.pop %v1879
    %v1943 = vmul.f32 %v1942, 0.6931472
    %v1944 = vlog2.pop %v1881
    %v1945 = vmul.f32 %v1944, 0.6931472
    %v1946 = vlog2.pop %v1883
    %v1947 = vmul.f32 %v1946, 0.6931472
    %v1948 = vlog2.pop %v1885
    %v1949 = vmul.f32 %v1948, 0.6931472
    %v1950 = vlog2.pop %v1887
    %v1951 = vmul.f32 %v1950, 0.6931472
    %v1952 = vlog2.pop %v1889
    %v1953 = vmul.f32 %v1952, 0.6931472
    %v1954 = vlog2.pop %v1891
    %v1955 = vmul.f32 %v1954, 0.6931472
    %v1956 = vlog2.pop %v1893
    %v1957 = vmul.f32 %v1956, 0.6931472
    %v1958 = vlog2.pop %v1895
    %v1959 = vmul.f32 %v1958, 0.6931472
    %v1960 = vlog2.pop %v1897
    %v1961 = vmul.f32 %v1960, 0.6931472
    %v1962 = vlog2.pop %v1899
    %v1963 = vmul.f32 %v1962, 0.6931472
    %v1964 = vlog2.pop %v1901
    %v1965 = vmul.f32 %v1964, 0.6931472
    %v1966 = vlog2.pop %v1903
    %v1967 = vmul.f32 %v1966, 0.6931472
    %v1968 = vlog2.pop %v1905
    %v1969 = vmul.f32 %v1968, 0.6931472
    %v1970 = vlog2.pop %v1907
    %v1971 = vmul.f32 %v1970, 0.6931472
    %v1972 = vlog2.pop %v1909
    %v1973 = vmul.f32 %v1972, 0.6931472
    %v1974 = vlog2.pop %v1911
    %v1975 = vmul.f32 %v1974, 0.6931472
    %v1976 = vlog2.pop %v1913
    %v1977 = vmul.f32 %v1976, 0.6931472
    %v1978 = vlog2.pop %v1915
    %v1979 = vmul.f32 %v1978, 0.6931472
    %v1980 = vlog2.pop %v1917
    %v1981 = vmul.f32 %v1980, 0.6931472
    %v1982 = vlog2.pop %v1919
    %v1983 = vmul.f32 %v1982, 0.6931472
    %v1984 = vlog2.pop %v1921
    %v1985 = vmul.f32 %v1984, 0.6931472
    %v1986 = vlog2.pop %v1923
    %v1987 = vmul.f32 %v1986, 0.6931472
    %v1988 = vlog2.pop %v1925
    %v1989 = vmul.f32 %v1988, 0.6931472
    %v1990 = vlog2.pop %v1927
    %v1991 = vmul.f32 %v1990, 0.6931472
    %v1992 = vlog2.pop %v1929
    %v1993 = vmul.f32 %v1992, 0.6931472
    %v1994 = vlog2.pop %v1931
    %v1995 = vmul.f32 %v1994, 0.6931472
    %v1996 = vlog2.pop %v1933
    %v1997 = vmul.f32 %v1996, 0.6931472
    %v1998 = vsub.f32 %v1742, %v1935
    %v1999 = vsub.f32 %v1743, %v1937
    %v2000 = vsub.f32 %v1744, %v1939
    %v2001 = vsub.f32 %v1745, %v1941
    %v2002 = vsub.f32 %v1746, %v1943
    %v2003 = vsub.f32 %v1747, %v1945
    %v2004 = vsub.f32 %v1748, %v1947
    %v2005 = vsub.f32 %v1749, %v1949
    %v2006 = vsub.f32 %v1750, %v1951
    %v2007 = vsub.f32 %v1751, %v1953
    %v2008 = vsub.f32 %v1752, %v1955
    %v2009 = vsub.f32 %v1753, %v1957
    %v2010 = vsub.f32 %v1754, %v1959
    %v2011 = vsub.f32 %v1755, %v1961
    %v2012 = vsub.f32 %v1756, %v1963
    %v2013 = vsub.f32 %v1757, %v1965
    %v2014 = vsub.f32 %v1758, %v1967
    %v2015 = vsub.f32 %v1759, %v1969
    %v2016 = vsub.f32 %v1760, %v1971
    %v2017 = vsub.f32 %v1761, %v1973
    %v2018 = vsub.f32 %v1762, %v1975
    %v2019 = vsub.f32 %v1763, %v1977
    %v2020 = vsub.f32 %v1764, %v1979
    %v2021 = vsub.f32 %v1765, %v1981
    %v2022 = vsub.f32 %v1766, %v1983
    %v2023 = vsub.f32 %v1767, %v1985
    %v2024 = vsub.f32 %v1768, %v1987
    %v2025 = vsub.f32 %v1769, %v1989
    %v2026 = vsub.f32 %v1770, %v1991
    %v2027 = vsub.f32 %v1771, %v1993
    %v2028 = vsub.f32 %v1772, %v1995
    %v2029 = vsub.f32 %v1773, %v1997
    %2030 = vst [vmem:[#allocation10] sm:$0xff] %v1998
    %2031 = vst [vmem:[#allocation10 + $0x8] sm:$0xff] %v1999
    %2032 = vst [vmem:[#allocation10 + $0x10] sm:$0xff] %v2000
    %2033 = vst [vmem:[#allocation10 + $0x18] sm:$0xff] %v2001
    %2034 = vst [vmem:[#allocation10 + $0x20] sm:$0xff] %v2002
    %2035 = vst [vmem:[#allocation10 + $0x28] sm:$0xff] %v2003
    %2036 = vst [vmem:[#allocation10 + $0x30] sm:$0xff] %v2004
    %2037 = vst [vmem:[#allocation10 + $0x38] sm:$0xff] %v2005
    %2038 = vst [vmem:[#allocation10 + $0x40] sm:$0xff] %v2006
    %2039 = vst [vmem:[#allocation10 + $0x48] sm:$0xff] %v2007
    %2040 = vst [vmem:[#allocation10 + $0x50] sm:$0xff] %v2008
    %2041 = vst [vmem:[#allocation10 + $0x58] sm:$0xff] %v2009
    %2042 = vst [vmem:[#allocation10 + $0x60] sm:$0xff] %v2010
    %2043 = vst [vmem:[#allocation10 + $0x68] sm:$0xff] %v2011
    %2044 = vst [vmem:[#allocation10 + $0x70] sm:$0xff] %v2012
    %2045 = vst [vmem:[#allocation10 + $0x78] sm:$0xff] %v2013
    %2046 = vst [vmem:[#allocation10 + $0x80] sm:$0xff] %v2014
    %2047 = vst [vmem:[#allocation10 + $0x88] sm:$0xff] %v2015
    %2048 = vst [vmem:[#allocation10 + $0x90] sm:$0xff] %v2016
    %2049 = vst [vmem:[#allocation10 + $0x98] sm:$0xff] %v2017
    %2050 = vst [vmem:[#allocation10 + $0xa0] sm:$0xff] %v2018
    %2051 = vst [vmem:[#allocation10 + $0xa8] sm:$0xff] %v2019
    %2052 = vst [vmem:[#allocation10 + $0xb0] sm:$0xff] %v2020
    %2053 = vst [vmem:[#allocation10 + $0xb8] sm:$0xff] %v2021
    %2054 = vst [vmem:[#allocation10 + $0xc0] sm:$0xff] %v2022
    %2055 = vst [vmem:[#allocation10 + $0xc8] sm:$0xff] %v2023
    %2056 = vst [vmem:[#allocation10 + $0xd0] sm:$0xff] %v2024
    %2057 = vst [vmem:[#allocation10 + $0xd8] sm:$0xff] %v2025
    %2058 = vst [vmem:[#allocation10 + $0xe0] sm:$0xff] %v2026
    %2059 = vst [vmem:[#allocation10 + $0xe8] sm:$0xff] %v2027
    %2060 = vst [vmem:[#allocation10 + $0xf0] sm:$0xff] %v2028
    %2061 = vst [vmem:[#allocation10 + $0xf8] sm:$0xff] %v2029
    // Predicated region
    $region38: #{tpu_custom_call.1} parent=1 // pred_check
      _
    $region39: #{tpu_custom_call.1} parent=1 // pred_check_branch
      %2063 = sbr.rel (0) target = $region41
    $region40: #{tpu_custom_call.1} parent=1 // pred_region
      %s2065 = ssub.s32 4096, 4096
      %2066 = vsyncadd [#allocation4], %s2065
      %s2067 = sshll.u32 [#allocation10], 4
      %s2068 = int_to_ptr.vmem [resolvable:$true] %s2067
      %2073 = dma.vmem_to_hbm [thread:$0]  %s2068, 4096, %s5, [#allocation4], 128, 128, 8
    $region41: #{tpu_custom_call.1} parent=1 // pred_fallthru
      _
    // Predicated region
    $region42: #{tpu_custom_call.1} parent=1 // pred_check
      _
    $region43: #{tpu_custom_call.1} parent=1 // pred_check_branch
      %2075 = sbr.rel (0) target = $region45
    $region44: #{tpu_custom_call.1} parent=1 // pred_region
      %2076 = dma.done [#allocation4], 4096
    $region45: #{tpu_custom_call.1} parent=1 // pred_fallthru
      _
    %2077 = vsyncpa [#allocation3], 1
    %2078 = vsyncpa [#allocation6], 1
    %2079 = vsyncpa [#allocation9], 1
    %2080 = vsyncpa [#allocation4], 1

</llo_original>
